<compile_context>
chip_gen: v5e
topology: v5e:2x2
jax: 0.10.0
libtpu: 0.0.40
codegen_flags: <defaults>
</compile_context>

<pallas_src>
import functools

import jax
import jax.numpy as jnp
import numpy as np
from jax.experimental import pallas as pl
from jax.experimental.pallas import tpu as pltpu


def _layer_norm(t, gamma, beta, eps):
    mu = jnp.mean(t, axis=-1, keepdims=True)
    var = jnp.mean(jnp.square(t - mu), axis=-1, keepdims=True)
    return (t - mu) * jax.lax.rsqrt(var + eps) * gamma + beta


# --------------------------------------------------------------------------
# Phase 1: LN1 + fused Q/K/V projection, written head-major.
# --------------------------------------------------------------------------
def _qkv_build_kernel(x_ref, g1_ref, b1_ref, wq_ref, wk_ref, wv_ref,
                      q_ref, k_ref, v_ref, *, num_heads, eps=1e-5):
    _, tn, C = x_ref.shape
    dh = C // num_heads
    cdt = q_ref.dtype                       # MXU input dtype

    xt = x_ref[0].astype(jnp.float32)                         # (TN, C)
    y = _layer_norm(xt, g1_ref[0], b1_ref[0], eps).astype(cdt)

    # Softmax scale is pre-folded into wq (see prepare_params).
    q = jnp.dot(y, wq_ref[...], preferred_element_type=jnp.float32).astype(cdt)
    k = jnp.dot(y, wk_ref[...], preferred_element_type=jnp.float32).astype(cdt)
    v = jnp.dot(y, wv_ref[...], preferred_element_type=jnp.float32).astype(cdt)

    # Cast BEFORE the head-major transpose (halves XLU / copy bytes for bf16).
    q_ref[0] = jnp.transpose(q.reshape(tn, num_heads, dh), (1, 0, 2))
    k_ref[0] = jnp.transpose(k.reshape(tn, num_heads, dh), (1, 0, 2))
    v_ref[0] = jnp.transpose(v.reshape(tn, num_heads, dh), (1, 0, 2))


# --------------------------------------------------------------------------
# Phase 2: attention (batched over heads) + output proj + LN2 + MLP + residuals.
# --------------------------------------------------------------------------
def _attn_mlp_kernel(x_ref, q_ref, k_ref, v_ref,
                     wproj_ref, bproj_ref, g2_ref, b2_ref,
                     w1_ref, bm1_ref, w2_ref, bm2_ref, o_ref,
                     *, num_heads, n_valid, eps=1e-5,
                     exp_dtype=jnp.float32, approx_recip=True):
    _, tn, C = x_ref.shape
    Np = k_ref.shape[2]
    cdt = q_ref.dtype

    xt = x_ref[0].astype(jnp.float32)                         # (TN, C)
    qh = q_ref[0]                                             # (H, TN, dh), cdt
    kh = k_ref[0]                                             # (H, Np, dh)
    vh = v_ref[0]                                             # (H, Np, dh)

    # Scores: contraction on trailing dims of both operands (no explicit K.T);
    # scale already folded into wq.
    s = jnp.einsum('htd,hnd->htn', qh, kh,
                   preferred_element_type=jnp.float32)        # (H, TN, Np) f32

    if n_valid < Np:  # mask zero-padded key positions (static check)
        key_idx = jax.lax.broadcasted_iota(jnp.int32, s.shape, 2)
        s = jnp.where(key_idx < n_valid, s, -1e30)

    m = jnp.max(s, axis=-1, keepdims=True)
    # exp in exp_dtype (bf16 on v6e/v7x doubles EUP throughput; use f32 on v5e)
    e = jnp.exp((s - m).astype(exp_dtype))                    # (H, TN, Np)
    denom = jnp.sum(e, axis=-1, keepdims=True, dtype=jnp.float32)

    # PV matmul on the UNNORMALIZED exponentials; normalize the small
    # (H, TN, dh) result instead of the big (H, TN, Np) tensor.
    pv = jnp.einsum('htn,hnd->htd', e.astype(cdt), vh,
                    preferred_element_type=jnp.float32)       # (H, TN, dh) f32
    o = pv * pl.reciprocal(denom, approx=approx_recip)

    # Cast before the (H,TN,dh)->(TN,H,dh) transpose, then merge heads.
    ao = jnp.transpose(o.astype(cdt), (1, 0, 2)).reshape(tn, C)
    attn_out = jnp.dot(ao, wproj_ref[...],
                       preferred_element_type=jnp.float32) + bproj_ref[0]
    x1 = xt + attn_out                                        # residual 1 (f32)

    # LayerNorm 2 + MLP (exact erf-based GELU, matching torch.nn.GELU default)
    y2 = _layer_norm(x1, g2_ref[0], b2_ref[0], eps)
    hid = jnp.dot(y2.astype(cdt), w1_ref[...],
                  preferred_element_type=jnp.float32) + bm1_ref[0]
    hid = 0.5 * hid * (1.0 + jax.lax.erf(hid * (2.0 ** -0.5)))
    mlp = jnp.dot(hid.astype(cdt), w2_ref[...],
                  preferred_element_type=jnp.float32) + bm2_ref[0]

    o_ref[0] = (x1 + mlp).astype(o_ref.dtype)


# --------------------------------------------------------------------------
# Wrapper
# --------------------------------------------------------------------------
def prepare_params(p, num_heads, compute_dtype=jnp.bfloat16):
    """Split / cast weights once (outside the per-call path).

    The softmax scale (head_dim**-0.5) is folded into wq here.
    LN params and biases stay f32 (they feed f32 math in the kernels).
    """
    C = p["wqkv"].shape[0]
    dh = C // num_heads
    scale = dh ** -0.5
    cdt = compute_dtype
    f32 = jnp.float32
    return {
        "g1": p["g1"].astype(f32), "b1": p["b1"].astype(f32),
        "g2": p["g2"].astype(f32), "b2": p["b2"].astype(f32),
        "wq": (p["wqkv"][:, :C] * scale).astype(cdt),
        "wk": p["wqkv"][:, C:2 * C].astype(cdt),
        "wv": p["wqkv"][:, 2 * C:].astype(cdt),
        "wproj": p["wproj"].astype(cdt), "bproj": p["bproj"].astype(f32),
        "w1": p["w1"].astype(cdt), "bm1": p["bm1"].astype(f32),
        "w2": p["w2"].astype(cdt), "bm2": p["bm2"].astype(f32),
    }


def block_forward(x, pp, num_heads, *, tile_n=None, exp_dtype=None,
                  vmem_limit_bytes=48 << 20):
    """Forward pass of `Block` using the two Pallas kernels above.

    pp: output of prepare_params().  vmem_limit_bytes default (48 MiB) is safe
    for v7x's 64 MiB/TC; raise it on v5e/v6e (128 MiB) to enable bigger tiles.
    """
    B, N, C = x.shape
    assert C % num_heads == 0
    dh = C // num_heads
    cdt = pp["wq"].dtype

    # Token-tile choice: lane/sublane friendly tiles, pad + mask instead of a
    # full-sequence fallback for awkward N (e.g. ViT's N=197).
    if tile_n is None:
        if N % 256 == 0 and N >= 256:
            tile_n = 256
        elif N % 128 == 0:
            tile_n = 128
        elif N <= 256:
            tile_n = N                      # single full-dim tile
        else:
            tile_n = 128                    # pad + mask below
    Np = int(-(-N // tile_n)) * tile_n
    T = Np // tile_n
    assert tile_n % 8 == 0 or tile_n == Np, "token tile must be sublane-aligned"
    x_pad = x if Np == N else jnp.pad(x, ((0, 0), (0, Np - N), (0, 0)))

    if exp_dtype is None:
        # NOTE: v5e has no bf16 EUP path -- pass exp_dtype=jnp.float32 there.
        exp_dtype = cdt
    approx_recip = (cdt != jnp.float32)     # exact reciprocal on the f32 path

    def resident(arr):
        # Constant-index operand: single-buffer it (no point double-buffering).
        nd = arr.ndim
        return pl.BlockSpec(arr.shape, lambda *_: (0,) * nd,
                            pipeline_mode=pl.Buffered(1))

    cparams = pltpu.CompilerParams(
        dimension_semantics=("parallel", "parallel"),
        vmem_limit_bytes=vmem_limit_bytes,
    )

    # ---- Phase 1: LN1 + Q/K/V projection, head-major outputs -------------
    q_hm, k_hm, v_hm = pl.pallas_call(
        functools.partial(_qkv_build_kernel, num_heads=num_heads),
        out_shape=[jax.ShapeDtypeStruct((B, num_heads, Np, dh), cdt)] * 3,
        grid=(B, T),
        in_specs=[
            pl.BlockSpec((1, tile_n, C), lambda b, t: (b, t, 0)),
            resident(pp["g1"]), resident(pp["b1"]),
            resident(pp["wq"]), resident(pp["wk"]), resident(pp["wv"]),
        ],
        out_specs=[pl.BlockSpec((1, num_heads, tile_n, dh),
                                lambda b, t: (b, 0, t, 0))] * 3,
        compiler_params=cparams,
    )(x_pad, pp["g1"], pp["b1"], pp["wq"], pp["wk"], pp["wv"])

    # ---- Phase 2: attention + proj + LN2 + MLP + residuals ---------------
    out = pl.pallas_call(
        functools.partial(_attn_mlp_kernel, num_heads=num_heads,
                          n_valid=N, exp_dtype=exp_dtype,
                          approx_recip=approx_recip),
        out_shape=jax.ShapeDtypeStruct((B, Np, C), x.dtype),
        grid=(B, T),
        in_specs=[
            pl.BlockSpec((1, tile_n, C), lambda b, t: (b, t, 0)),          # x
            pl.BlockSpec((1, num_heads, tile_n, dh),
                         lambda b, t: (b, 0, t, 0)),                       # Q
            pl.BlockSpec((1, num_heads, Np, dh),
                         lambda b, t: (b, 0, 0, 0)),                       # K
            pl.BlockSpec((1, num_heads, Np, dh),
                         lambda b, t: (b, 0, 0, 0)),                       # V
            resident(pp["wproj"]), resident(pp["bproj"]),
            resident(pp["g2"]), resident(pp["b2"]),
            resident(pp["w1"]), resident(pp["bm1"]),
            resident(pp["w2"]), resident(pp["bm2"]),
        ],
        out_specs=pl.BlockSpec((1, tile_n, C), lambda b, t: (b, t, 0)),
        compiler_params=cparams,
    )(x_pad, q_hm, k_hm, v_hm, pp["wproj"], pp["bproj"], pp["g2"], pp["b2"],
      pp["w1"], pp["bm1"], pp["w2"], pp["bm2"])

    return out[:, :N, :] if Np != N else out


def block_reference(x, p, num_heads):
    """Pure-JAX reference matching the PyTorch forward exactly (f32)."""
    def ln(t, g, b):
        mu = t.mean(-1, keepdims=True)
        var = jnp.square(t - mu).mean(-1, keepdims=True)
        return (t - mu) / jnp.sqrt(var + 1e-5) * g + b

    B, N, C = x.shape
    dh = C // num_heads
    y = ln(x, p["g1"][0], p["b1"][0])
    qkv = (y @ p["wqkv"]).reshape(B, N, 3, num_heads, dh).transpose(2, 0, 3, 1, 4)
    q, k, v = qkv[0], qkv[1], qkv[2]
    attn = jax.nn.softmax(jnp.einsum("bhnd,bhmd->bhnm", q, k) * dh ** -0.5, axis=-1)
    ao = jnp.einsum("bhnm,bhmd->bhnd", attn, v).transpose(0, 2, 1, 3).reshape(B, N, C)
    x1 = x + ao @ p["wproj"] + p["bproj"][0]
    y2 = ln(x1, p["g2"][0], p["b2"][0])
    h = jax.nn.gelu(y2 @ p["w1"] + p["bm1"][0], approximate=False)
    return x1 + h @ p["w2"] + p["bm2"][0]


if __name__ == "__main__":
    B, N, C = 2, 16, 32
    num_heads = 4
    mlp_ratio = 4.0
    H = int(C * mlp_ratio)

    key = jax.random.PRNGKey(0)
    ks = jax.random.split(key, 10)
    f32 = jnp.float32

    params = {
        # LayerNorms (affine)
        "g1": jnp.ones((1, C), f32),
        "b1": jnp.zeros((1, C), f32),
        "g2": jnp.ones((1, C), f32),
        "b2": jnp.zeros((1, C), f32),
        # Attention: qkv (no bias, qkv_bias=False) and output projection
        "wqkv": 0.05 * jax.random.normal(ks[0], (C, 3 * C), f32),
        "wproj": 0.05 * jax.random.normal(ks[1], (C, C), f32),
        "bproj": 0.01 * jax.random.normal(ks[2], (1, C), f32),
        # MLP
        "w1": 0.05 * jax.random.normal(ks[3], (C, H), f32),
        "bm1": 0.01 * jax.random.normal(ks[4], (1, H), f32),
        "w2": 0.05 * jax.random.normal(ks[5], (H, C), f32),
        "bm2": 0.01 * jax.random.normal(ks[6], (1, C), f32),
    }

    x = jax.random.normal(ks[7], (B, N, C), f32)
    ref = jax.block_until_ready(block_reference(x, params, num_heads))

    # Production path: bf16 MXU inputs, bf16 exp, f32 accumulation.
    pp_bf16 = jax.tree_util.tree_map(jax.block_until_ready,
                                     prepare_params(params, num_heads,
                                                    compute_dtype=jnp.bfloat16))
    out_bf16 = jax.block_until_ready(block_forward(x, pp_bf16, num_heads))
    np.testing.assert_allclose(np.asarray(out_bf16), np.asarray(ref),
                               rtol=3e-2, atol=3e-2)

    # f32 compute path of the same kernels for a tight numerical check
    # (exact reciprocal, f32 exp).
    pp_f32 = prepare_params(params, num_heads, compute_dtype=jnp.float32)
    out_f32 = jax.block_until_ready(block_forward(x, pp_f32, num_heads))
    np.testing.assert_allclose(np.asarray(out_f32), np.asarray(ref),
                               rtol=2e-3, atol=2e-3)

    # Ragged-sequence path: N=20 padded to 32 with two 16-token tiles and
    # key masking (exercises the pad+mask code instead of a fallback tile).
    x2 = jax.random.normal(ks[8], (B, 20, C), f32)
    ref2 = block_reference(x2, params, num_heads)
    out2 = jax.block_until_ready(block_forward(x2, pp_f32, num_heads, tile_n=16))
    np.testing.assert_allclose(np.asarray(out2), np.asarray(ref2),
                               rtol=2e-3, atol=2e-3)

    print("KERNEL_OK")
</pallas_src>

<mosaic_0001>
module attributes {stable_mosaic.version = 11 : i64} {
  func.func @_qkv_build_kernel(%arg0: i32, %arg1: i32, %arg2: memref<1x16x32xf32, #tpu.memory_space<vmem>>, %arg3: memref<1x32xf32, #tpu.memory_space<vmem>>, %arg4: memref<1x32xf32, #tpu.memory_space<vmem>>, %arg5: memref<32x32xbf16, #tpu.memory_space<vmem>>, %arg6: memref<32x32xbf16, #tpu.memory_space<vmem>>, %arg7: memref<32x32xbf16, #tpu.memory_space<vmem>>, %arg8: memref<1x4x16x8xbf16, #tpu.memory_space<vmem>>, %arg9: memref<1x4x16x8xbf16, #tpu.memory_space<vmem>>, %arg10: memref<1x4x16x8xbf16, #tpu.memory_space<vmem>>) attributes {dimension_semantics = [#tpu.dimension_semantics<parallel>, #tpu.dimension_semantics<parallel>], iteration_bounds = array<i64: 2, 1>, scalar_prefetch = 0 : i64, scratch_operands = 0 : i64, tpu.core_type = #tpu.core_type<tc>, window_params = [{transform_indices = @transform_0, window_bounds = array<i64: 1, 16, 32>}, {pipeline_mode = #tpu.pipeline_mode<synchronous>, transform_indices = @transform_1, window_bounds = array<i64: 1, 32>}, {pipeline_mode = #tpu.pipeline_mode<synchronous>, transform_indices = @transform_2, window_bounds = array<i64: 1, 32>}, {pipeline_mode = #tpu.pipeline_mode<synchronous>, transform_indices = @transform_3, window_bounds = array<i64: 32, 32>}, {pipeline_mode = #tpu.pipeline_mode<synchronous>, transform_indices = @transform_4, window_bounds = array<i64: 32, 32>}, {pipeline_mode = #tpu.pipeline_mode<synchronous>, transform_indices = @transform_5, window_bounds = array<i64: 32, 32>}, {transform_indices = @transform_6, window_bounds = array<i64: 1, 4, 16, 8>}, {transform_indices = @transform_7, window_bounds = array<i64: 1, 4, 16, 8>}, {transform_indices = @transform_8, window_bounds = array<i64: 1, 4, 16, 8>}]} {
    %c0 = arith.constant 0 : index
    %c0_0 = arith.constant 0 : index
    %c0_1 = arith.constant 0 : index
    %0 = vector.load %arg2[%c0, %c0_0, %c0_1] : memref<1x16x32xf32, #tpu.memory_space<vmem>>, vector<1x16x32xf32>
    %1 = vector.shape_cast %0 : vector<1x16x32xf32> to vector<16x32xf32>
    %c0_2 = arith.constant 0 : index
    %c0_3 = arith.constant 0 : index
    %2 = vector.load %arg3[%c0_2, %c0_3] : memref<1x32xf32, #tpu.memory_space<vmem>>, vector<1x32xf32>
    %3 = vector.shape_cast %2 : vector<1x32xf32> to vector<32xf32>
    %c0_4 = arith.constant 0 : index
    %c0_5 = arith.constant 0 : index
    %4 = vector.load %arg4[%c0_4, %c0_5] : memref<1x32xf32, #tpu.memory_space<vmem>>, vector<1x32xf32>
    %5 = vector.shape_cast %4 : vector<1x32xf32> to vector<32xf32>
    %cst = arith.constant dense<0.000000e+00> : vector<16xf32>
    %6 = vector.multi_reduction <add>, %1, %cst [1] : vector<16x32xf32> to vector<16xf32>
    %7 = vector.shape_cast %6 : vector<16xf32> to vector<16x1xf32>
    %cst_6 = arith.constant 3.200000e+01 : f32
    %8 = vector.broadcast %cst_6 : f32 to vector<16x1xf32>
    %9 = arith.divf %7, %8 : vector<16x1xf32>
    %10 = vector.broadcast %9 : vector<16x1xf32> to vector<16x32xf32>
    %11 = arith.subf %1, %10 : vector<16x32xf32>
    %12 = arith.mulf %11, %11 : vector<16x32xf32>
    %cst_7 = arith.constant dense<0.000000e+00> : vector<16xf32>
    %13 = vector.multi_reduction <add>, %12, %cst_7 [1] : vector<16x32xf32> to vector<16xf32>
    %14 = vector.shape_cast %13 : vector<16xf32> to vector<16x1xf32>
    %cst_8 = arith.constant 3.200000e+01 : f32
    %15 = vector.broadcast %cst_8 : f32 to vector<16x1xf32>
    %16 = arith.divf %14, %15 : vector<16x1xf32>
    %17 = vector.broadcast %9 : vector<16x1xf32> to vector<16x32xf32>
    %18 = arith.subf %1, %17 : vector<16x32xf32>
    %cst_9 = arith.constant 9.99999974E-6 : f32
    %19 = vector.broadcast %cst_9 : f32 to vector<16x1xf32>
    %20 = arith.addf %16, %19 : vector<16x1xf32>
    %21 = math.rsqrt %20 : vector<16x1xf32>
    %22 = vector.broadcast %21 : vector<16x1xf32> to vector<16x32xf32>
    %23 = arith.mulf %18, %22 : vector<16x32xf32>
    %24 = vector.shape_cast %3 : vector<32xf32> to vector<1x32xf32>
    %25 = vector.broadcast %24 : vector<1x32xf32> to vector<16x32xf32>
    %26 = arith.mulf %23, %25 : vector<16x32xf32>
    %27 = vector.shape_cast %5 : vector<32xf32> to vector<1x32xf32>
    %28 = vector.broadcast %27 : vector<1x32xf32> to vector<16x32xf32>
    %29 = arith.addf %26, %28 : vector<16x32xf32>
    %30 = arith.truncf %29 : vector<16x32xf32> to vector<16x32xbf16>
    %c0_10 = arith.constant 0 : index
    %c0_11 = arith.constant 0 : index
    %31 = vector.load %arg5[%c0_10, %c0_11] : memref<32x32xbf16, #tpu.memory_space<vmem>>, vector<32x32xbf16>
    %cst_12 = arith.constant dense<0.000000e+00> : vector<16x32xf32>
    %32 = tpu.matmul %30, %31, %cst_12 {dimension_numbers = #tpu.dot_dimension_numbers<[1], [0], [0], [1], [0, 0, 1, 1], [], []>} : vector<16x32xbf16>, vector<32x32xbf16>, vector<16x32xf32> -> vector<16x32xf32>
    %33 = arith.truncf %32 : vector<16x32xf32> to vector<16x32xbf16>
    %c0_13 = arith.constant 0 : index
    %c0_14 = arith.constant 0 : index
    %34 = vector.load %arg6[%c0_13, %c0_14] : memref<32x32xbf16, #tpu.memory_space<vmem>>, vector<32x32xbf16>
    %cst_15 = arith.constant dense<0.000000e+00> : vector<16x32xf32>
    %35 = tpu.matmul %30, %34, %cst_15 {dimension_numbers = #tpu.dot_dimension_numbers<[1], [0], [0], [1], [0, 0, 1, 1], [], []>} : vector<16x32xbf16>, vector<32x32xbf16>, vector<16x32xf32> -> vector<16x32xf32>
    %36 = arith.truncf %35 : vector<16x32xf32> to vector<16x32xbf16>
    %c0_16 = arith.constant 0 : index
    %c0_17 = arith.constant 0 : index
    %37 = vector.load %arg7[%c0_16, %c0_17] : memref<32x32xbf16, #tpu.memory_space<vmem>>, vector<32x32xbf16>
    %cst_18 = arith.constant dense<0.000000e+00> : vector<16x32xf32>
    %38 = tpu.matmul %30, %37, %cst_18 {dimension_numbers = #tpu.dot_dimension_numbers<[1], [0], [0], [1], [0, 0, 1, 1], [], []>} : vector<16x32xbf16>, vector<32x32xbf16>, vector<16x32xf32> -> vector<16x32xf32>
    %39 = arith.truncf %38 : vector<16x32xf32> to vector<16x32xbf16>
    %40 = vector.shape_cast %33 : vector<16x32xbf16> to vector<16x4x8xbf16>
    %41 = tpu.transpose %40, [1, 0, 2] : vector<16x4x8xbf16> -> vector<4x16x8xbf16>
    %c0_19 = arith.constant 0 : index
    %c0_20 = arith.constant 0 : index
    %c0_21 = arith.constant 0 : index
    %c0_22 = arith.constant 0 : index
    %42 = vector.load %arg8[%c0_19, %c0_20, %c0_21, %c0_22] : memref<1x4x16x8xbf16, #tpu.memory_space<vmem>>, vector<1x4x16x8xbf16>
    %43 = vector.shape_cast %42 : vector<1x4x16x8xbf16> to vector<4x16x8xbf16>
    %44 = vector.shape_cast %41 : vector<4x16x8xbf16> to vector<1x4x16x8xbf16>
    tpu.vector_store %arg8[%c0_19, %c0_20, %c0_21, %c0_22], %44 {strides = array<i32>} : memref<1x4x16x8xbf16, #tpu.memory_space<vmem>>, vector<1x4x16x8xbf16>,
    %45 = vector.shape_cast %36 : vector<16x32xbf16> to vector<16x4x8xbf16>
    %46 = tpu.transpose %45, [1, 0, 2] : vector<16x4x8xbf16> -> vector<4x16x8xbf16>
    %c0_23 = arith.constant 0 : index
    %c0_24 = arith.constant 0 : index
    %c0_25 = arith.constant 0 : index
    %c0_26 = arith.constant 0 : index
    %47 = vector.load %arg9[%c0_23, %c0_24, %c0_25, %c0_26] : memref<1x4x16x8xbf16, #tpu.memory_space<vmem>>, vector<1x4x16x8xbf16>
    %48 = vector.shape_cast %47 : vector<1x4x16x8xbf16> to vector<4x16x8xbf16>
    %49 = vector.shape_cast %46 : vector<4x16x8xbf16> to vector<1x4x16x8xbf16>
    tpu.vector_store %arg9[%c0_23, %c0_24, %c0_25, %c0_26], %49 {strides = array<i32>} : memref<1x4x16x8xbf16, #tpu.memory_space<vmem>>, vector<1x4x16x8xbf16>,
    %50 = vector.shape_cast %39 : vector<16x32xbf16> to vector<16x4x8xbf16>
    %51 = tpu.transpose %50, [1, 0, 2] : vector<16x4x8xbf16> -> vector<4x16x8xbf16>
    %c0_27 = arith.constant 0 : index
    %c0_28 = arith.constant 0 : index
    %c0_29 = arith.constant 0 : index
    %c0_30 = arith.constant 0 : index
    %52 = vector.load %arg10[%c0_27, %c0_28, %c0_29, %c0_30] : memref<1x4x16x8xbf16, #tpu.memory_space<vmem>>, vector<1x4x16x8xbf16>
    %53 = vector.shape_cast %52 : vector<1x4x16x8xbf16> to vector<4x16x8xbf16>
    %54 = vector.shape_cast %51 : vector<4x16x8xbf16> to vector<1x4x16x8xbf16>
    tpu.vector_store %arg10[%c0_27, %c0_28, %c0_29, %c0_30], %54 {strides = array<i32>} : memref<1x4x16x8xbf16, #tpu.memory_space<vmem>>, vector<1x4x16x8xbf16>,
    return
  }
  func.func @transform_0(%arg0: i32, %arg1: i32) -> (i32, i32, i32) {
    %c0_i32 = arith.constant 0 : i32
    %c0_i32_0 = arith.constant 0 : i32
    return %arg0, %arg1, %c0_i32 : i32, i32, i32
  }
  func.func @transform_1(%arg0: i32, %arg1: i32) -> (i32, i32) {
    %c0_i32 = arith.constant 0 : i32
    %c0_i32_0 = arith.constant 0 : i32
    %c0_i32_1 = arith.constant 0 : i32
    return %c0_i32, %c0_i32_0 : i32, i32
  }
  func.func @transform_2(%arg0: i32, %arg1: i32) -> (i32, i32) {
    %c0_i32 = arith.constant 0 : i32
    %c0_i32_0 = arith.constant 0 : i32
    %c0_i32_1 = arith.constant 0 : i32
    return %c0_i32, %c0_i32_0 : i32, i32
  }
  func.func @transform_3(%arg0: i32, %arg1: i32) -> (i32, i32) {
    %c0_i32 = arith.constant 0 : i32
    %c0_i32_0 = arith.constant 0 : i32
    %c0_i32_1 = arith.constant 0 : i32
    return %c0_i32, %c0_i32_0 : i32, i32
  }
  func.func @transform_4(%arg0: i32, %arg1: i32) -> (i32, i32) {
    %c0_i32 = arith.constant 0 : i32
    %c0_i32_0 = arith.constant 0 : i32
    %c0_i32_1 = arith.constant 0 : i32
    return %c0_i32, %c0_i32_0 : i32, i32
  }
  func.func @transform_5(%arg0: i32, %arg1: i32) -> (i32, i32) {
    %c0_i32 = arith.constant 0 : i32
    %c0_i32_0 = arith.constant 0 : i32
    %c0_i32_1 = arith.constant 0 : i32
    return %c0_i32, %c0_i32_0 : i32, i32
  }
  func.func @transform_6(%arg0: i32, %arg1: i32) -> (i32, i32, i32, i32) {
    %c0_i32 = arith.constant 0 : i32
    %c0_i32_0 = arith.constant 0 : i32
    %c0_i32_1 = arith.constant 0 : i32
    return %arg0, %c0_i32, %arg1, %c0_i32_0 : i32, i32, i32, i32
  }
  func.func @transform_7(%arg0: i32, %arg1: i32) -> (i32, i32, i32, i32) {
    %c0_i32 = arith.constant 0 : i32
    %c0_i32_0 = arith.constant 0 : i32
    %c0_i32_1 = arith.constant 0 : i32
    return %arg0, %c0_i32, %arg1, %c0_i32_0 : i32, i32, i32, i32
  }
  func.func @transform_8(%arg0: i32, %arg1: i32) -> (i32, i32, i32, i32) {
    %c0_i32 = arith.constant 0 : i32
    %c0_i32_0 = arith.constant 0 : i32
    %c0_i32_1 = arith.constant 0 : i32
    return %arg0, %c0_i32, %arg1, %c0_i32_0 : i32, i32, i32, i32
  }
}

</mosaic_0001>

<llo_original>
// kernel: tpu_custom_call.1
$region0: #{tpu_custom_call.1}
  #allocation0 [shape = 'u32[]', space=smem, size = 0x4, offset = 0x4, fixed_abs, tag = 'smem constant byte address 0x4 - core index']
  #allocation1 [shape = 'u32[72,128]{1,0:T(1,128)}', space=vmem, size = 0x9000, scoped, tag = 'internal scratch']
  %s0 = inlined_call_operand.hbm [shape: f32[2,16,32], index: 0, kind: input, shape index: {}]
  %s1 = inlined_call_operand.hbm [shape: f32[1,32], index: 1, kind: input, shape index: {}]
  %s2 = inlined_call_operand.vmem [shape: f32[1,32], index: 2, kind: input, shape index: {}]
  %s3 = inlined_call_operand.hbm [shape: bf16[32,32], index: 3, kind: input, shape index: {}]
  %s4 = inlined_call_operand.hbm [shape: bf16[32,32], index: 4, kind: input, shape index: {}]
  %s5 = inlined_call_operand.hbm [shape: bf16[32,32], index: 5, kind: input, shape index: {}]
  %s6 = inlined_call_operand.vmem [shape: bf16[2,4,16,8], index: 6, kind: output, shape index: {0}]
  %s7 = inlined_call_operand.vmem [shape: bf16[2,4,16,8], index: 7, kind: output, shape index: {1}]
  %s8 = inlined_call_operand.vmem [shape: bf16[2,4,16,8], index: 8, kind: output, shape index: {2}]
  %9 = xla_tuple %s6, %s7, %s8
  %s10 = sld [smem:[#allocation0]]
  $region93: #{tpu_custom_call.1} parent=0
    _
  %s12 = ssub.s32 1, %s10
  %s13 = scalar_select 0, %s12, %s10
  $region1: #{tpu_custom_call.1} parent=0
    #allocation2 [shape = 'u8[16384]{0}', space=vmem, size = 0x4000, scoped, tag = 'input window, operand 0']
    #allocation3 [shape = 's32[2]{0}', space=sflag, size = 0x8, scoped, tag = 'scoped memory for tpu_custom_call.1']
    #allocation4 [shape = 'u8[512]{0}', space=vmem, size = 0x400, scoped, tag = 'input window, operand 1, single buffered']
    #allocation5 [shape = 's32[1]{0}', space=sflag, size = 0x4, scoped, tag = 'scoped memory for tpu_custom_call.1']
    #allocation6 [shape = 'u8[8192]{0}', space=vmem, size = 0x2000, scoped, tag = 'input window, operand 3, single buffered']
    #allocation7 [shape = 'u8[8192]{0}', space=vmem, size = 0x2000, scoped, tag = 'input window, operand 4, single buffered']
    #allocation8 [shape = 's32[1]{0}', space=sflag, size = 0x4, scoped, tag = 'scoped memory for tpu_custom_call.1']
    #allocation9 [shape = 'u8[8192]{0}', space=vmem, size = 0x2000, scoped, tag = 'input window, operand 5, single buffered']
    %14 = vsyncpa [#allocation3], 0
    %s15 = scalar_lea.sflag [#allocation3], 1
    %16 = vsyncpa %s15, 0
    %17 = vsyncpa [#allocation5], 0
    %18 = vsyncpa [#allocation8], 0
    loop: start=0, step=1, limit=4
    $region2: #{tpu_custom_call.1} parent=1 // loop_pre_header
      _
    $region3: #{tpu_custom_call.1} parent=1 // loop_header
      %s20 = sphi 0, %s24
      %p21 = scmp.ge.s32.totalorder %s20, 4
      %s27 = sphi 0, %s39
      %s28 = sphi 0, %s35
      %s29 = sphi 0, %s27
      %s30 = sphi 0, %s28
      %s31 = sphi 0, %s29
      %s32 = sphi 0, %s30
      %s44 = sphi 0, %s46
      %s47 = sphi 0, %s44
      %s48 = sphi 0, %s47
      %s64 = sphi 0, %s48
      %s68 = sphi 0, %s68
      %s70 = sphi 0, %s68
      %s71 = sphi 0, %s70
      %s85 = sphi 0, %s71
      %s89 = sphi 0, %s89
      %s91 = sphi 0, %s89
      %s92 = sphi 0, %s91
      %s106 = sphi 0, %s92
      %s110 = sphi 0, %s110
      %s112 = sphi 0, %s110
      %s113 = sphi 0, %s112
      %s127 = sphi 0, %s113
      %s131 = sphi 0, %s131
      %s133 = sphi 0, %s131
      %s134 = sphi 0, %s133
      %s148 = sphi 0, %s134
      %s152 = sphi 0, %s152
      %s154 = sphi 0, %s152
      %s155 = sphi 0, %s154
      %s169 = sphi 0, %s155
      %s177 = sphi 0, %s179
      %s180 = sphi 0, %s177
      %s181 = sphi 0, %s180
      %s197 = sphi 0, %s181
      %s205 = sphi 0, %s207
      %s208 = sphi 0, %s205
      %s209 = sphi 0, %s208
      %s225 = sphi 0, %s209
      %s233 = sphi 0, %s235
      %s236 = sphi 0, %s233
      %s237 = sphi 0, %s236
      %s253 = sphi 0, %s237
    $region4: #{tpu_custom_call.1} parent=1 // loop_header_branch
      %23 = sbr.rel (%p21) target = $region8
    $region5: #{tpu_custom_call.1} parent=1 // loop_body
      %s25 = ssub.s32 %s20, 1
      %s26 = ssub.s32 %s20, 2
      %s33 = sadd.s32 1, %s28
      %p34 = scmp.ge.s32.totalorder %s33, 1
      %s35 = scalar_select %p34, 0, %s33
      %s36 = sadd.s32 1, %s27
      %s37 = scalar_select %p34, %s36, %s27
      %p38 = scmp.ge.s32.totalorder %s37, 2
      %s39 = scalar_select %p38, 0, %s37
      %s40 = ssub.s32 %s27, %s39
      %s41 = ssub.s32 %s28, %s35
      %s42 = sor.u32 %s40, %s41
      %p43 = scmp.eq.s32.totalorder %s42, 0
      %s45 = sadd.s32 %s44, 1
      %s46 = scalar_select %p43, %s44, %s45
      %p49 = pneg %p43
      %p50 = scmp.eq.s32.totalorder %s20, 1
      %p51 = por %p49, %p50
      %p52 = scmp.ne.s32.totalorder %s44, %s47
      %p53 = scmp.eq.s32.totalorder %s20, 0
      %p54 = por %p52, %p53
      %p55 = scmp.ne.s32.totalorder %s44, %s47
      %p56 = scmp.eq.s32.totalorder %s25, 1
      %p57 = por %p55, %p56
      %p58 = scmp.ne.s32.totalorder %s47, %s48
      %p59 = scmp.eq.s32.totalorder %s25, 0
      %p60 = por %p58, %p59
      %p61 = scmp.ne.s32.totalorder %s47, %s48
      %p62 = scmp.eq.s32.totalorder %s26, 1
      %p63 = por %p61, %p62
      %p65 = scmp.ne.s32.totalorder %s48, %s64
      %p66 = scmp.eq.s32.totalorder %s26, 0
      %p67 = por %p65, %p66
      %s69 = sadd.s32 %s68, 1
      %p72 = scmp.eq.s32.totalorder %s20, 1
      %p73 = scmp.ne.s32.totalorder %s68, %s70
      %p74 = scmp.eq.s32.totalorder %s20, 0
      %p75 = por %p73, %p74
      %p76 = scmp.ne.s32.totalorder %s68, %s70
      %p77 = scmp.eq.s32.totalorder %s25, 1
      %p78 = por %p76, %p77
      %p79 = scmp.ne.s32.totalorder %s70, %s71
      %p80 = scmp.eq.s32.totalorder %s25, 0
      %p81 = por %p79, %p80
      %p82 = scmp.ne.s32.totalorder %s70, %s71
      %p83 = scmp.eq.s32.totalorder %s26, 1
      %p84 = por %p82, %p83
      %p86 = scmp.ne.s32.totalorder %s71, %s85
      %p87 = scmp.eq.s32.totalorder %s26, 0
      %p88 = por %p86, %p87
      %s90 = sadd.s32 %s89, 1
      %p93 = scmp.eq.s32.totalorder %s20, 1
      %p94 = scmp.ne.s32.totalorder %s89, %s91
      %p95 = scmp.eq.s32.totalorder %s20, 0
      %p96 = por %p94, %p95
      %p97 = scmp.ne.s32.totalorder %s89, %s91
      %p98 = scmp.eq.s32.totalorder %s25, 1
      %p99 = por %p97, %p98
      %p100 = scmp.ne.s32.totalorder %s91, %s92
      %p101 = scmp.eq.s32.totalorder %s25, 0
      %p102 = por %p100, %p101
      %p103 = scmp.ne.s32.totalorder %s91, %s92
      %p104 = scmp.eq.s32.totalorder %s26, 1
      %p105 = por %p103, %p104
      %p107 = scmp.ne.s32.totalorder %s92, %s106
      %p108 = scmp.eq.s32.totalorder %s26, 0
      %p109 = por %p107, %p108
      %s111 = sadd.s32 %s110, 1
      %p114 = scmp.eq.s32.totalorder %s20, 1
      %p115 = scmp.ne.s32.totalorder %s110, %s112
      %p116 = scmp.eq.s32.totalorder %s20, 0
      %p117 = por %p115, %p116
      %p118 = scmp.ne.s32.totalorder %s110, %s112
      %p119 = scmp.eq.s32.totalorder %s25, 1
      %p120 = por %p118, %p119
      %p121 = scmp.ne.s32.totalorder %s112, %s113
      %p122 = scmp.eq.s32.totalorder %s25, 0
      %p123 = por %p121, %p122
      %p124 = scmp.ne.s32.totalorder %s112, %s113
      %p125 = scmp.eq.s32.totalorder %s26, 1
      %p126 = por %p124, %p125
      %p128 = scmp.ne.s32.totalorder %s113, %s127
      %p129 = scmp.eq.s32.totalorder %s26, 0
      %p130 = por %p128, %p129
      %s132 = sadd.s32 %s131, 1
      %p135 = scmp.eq.s32.totalorder %s20, 1
      %p136 = scmp.ne.s32.totalorder %s131, %s133
      %p137 = scmp.eq.s32.totalorder %s20, 0
      %p138 = por %p136, %p137
      %p139 = scmp.ne.s32.totalorder %s131, %s133
      %p140 = scmp.eq.s32.totalorder %s25, 1
      %p141 = por %p139, %p140
      %p142 = scmp.ne.s32.totalorder %s133, %s134
      %p143 = scmp.eq.s32.totalorder %s25, 0
      %p144 = por %p142, %p143
      %p145 = scmp.ne.s32.totalorder %s133, %s134
      %p146 = scmp.eq.s32.totalorder %s26, 1
      %p147 = por %p145, %p146
      %p149 = scmp.ne.s32.totalorder %s134, %s148
      %p150 = scmp.eq.s32.totalorder %s26, 0
      %p151 = por %p149, %p150
      %s153 = sadd.s32 %s152, 1
      %p156 = scmp.eq.s32.totalorder %s20, 1
      %p157 = scmp.ne.s32.totalorder %s152, %s154
      %p158 = scmp.eq.s32.totalorder %s20, 0
      %p159 = por %p157, %p158
      %p160 = scmp.ne.s32.totalorder %s152, %s154
      %p161 = scmp.eq.s32.totalorder %s25, 1
      %p162 = por %p160, %p161
      %p163 = scmp.ne.s32.totalorder %s154, %s155
      %p164 = scmp.eq.s32.totalorder %s25, 0
      %p165 = por %p163, %p164
      %p166 = scmp.ne.s32.totalorder %s154, %s155
      %p167 = scmp.eq.s32.totalorder %s26, 1
      %p168 = por %p166, %p167
      %p170 = scmp.ne.s32.totalorder %s155, %s169
      %p171 = scmp.eq.s32.totalorder %s26, 0
      %p172 = por %p170, %p171
      %s173 = ssub.s32 %s27, %s39
      %s174 = ssub.s32 %s28, %s35
      %s175 = sor.u32 %s173, %s174
      %p176 = scmp.eq.s32.totalorder %s175, 0
      %s178 = sadd.s32 %s177, 1
      %s179 = scalar_select %p176, %s177, %s178
      %p182 = pneg %p176
      %p183 = scmp.eq.s32.totalorder %s20, 1
      %p184 = por %p182, %p183
      %p185 = scmp.ne.s32.totalorder %s177, %s180
      %p186 = scmp.eq.s32.totalorder %s20, 0
      %p187 = por %p185, %p186
      %p188 = scmp.ne.s32.totalorder %s177, %s180
      %p189 = scmp.eq.s32.totalorder %s25, 1
      %p190 = por %p188, %p189
      %p191 = scmp.ne.s32.totalorder %s180, %s181
      %p192 = scmp.eq.s32.totalorder %s25, 0
      %p193 = por %p191, %p192
      %p194 = scmp.ne.s32.totalorder %s180, %s181
      %p195 = scmp.eq.s32.totalorder %s26, 1
      %p196 = por %p194, %p195
      %p198 = scmp.ne.s32.totalorder %s181, %s197
      %p199 = scmp.eq.s32.totalorder %s26, 0
      %p200 = por %p198, %p199
      %s201 = ssub.s32 %s27, %s39
      %s202 = ssub.s32 %s28, %s35
      %s203 = sor.u32 %s201, %s202
      %p204 = scmp.eq.s32.totalorder %s203, 0
      %s206 = sadd.s32 %s205, 1
      %s207 = scalar_select %p204, %s205, %s206
      %p210 = pneg %p204
      %p211 = scmp.eq.s32.totalorder %s20, 1
      %p212 = por %p210, %p211
      %p213 = scmp.ne.s32.totalorder %s205, %s208
      %p214 = scmp.eq.s32.totalorder %s20, 0
      %p215 = por %p213, %p214
      %p216 = scmp.ne.s32.totalorder %s205, %s208
      %p217 = scmp.eq.s32.totalorder %s25, 1
      %p218 = por %p216, %p217
      %p219 = scmp.ne.s32.totalorder %s208, %s209
      %p220 = scmp.eq.s32.totalorder %s25, 0
      %p221 = por %p219, %p220
      %p222 = scmp.ne.s32.totalorder %s208, %s209
      %p223 = scmp.eq.s32.totalorder %s26, 1
      %p224 = por %p222, %p223
      %p226 = scmp.ne.s32.totalorder %s209, %s225
      %p227 = scmp.eq.s32.totalorder %s26, 0
      %p228 = por %p226, %p227
      %s229 = ssub.s32 %s27, %s39
      %s230 = ssub.s32 %s28, %s35
      %s231 = sor.u32 %s229, %s230
      %p232 = scmp.eq.s32.totalorder %s231, 0
      %s234 = sadd.s32 %s233, 1
      %s235 = scalar_select %p232, %s233, %s234
      %p238 = pneg %p232
      %p239 = scmp.eq.s32.totalorder %s20, 1
      %p240 = por %p238, %p239
      %p241 = scmp.ne.s32.totalorder %s233, %s236
      %p242 = scmp.eq.s32.totalorder %s20, 0
      %p243 = por %p241, %p242
      %p244 = scmp.ne.s32.totalorder %s233, %s236
      %p245 = scmp.eq.s32.totalorder %s25, 1
      %p246 = por %p244, %p245
      %p247 = scmp.ne.s32.totalorder %s236, %s237
      %p248 = scmp.eq.s32.totalorder %s25, 0
      %p249 = por %p247, %p248
      %p250 = scmp.ne.s32.totalorder %s236, %s237
      %p251 = scmp.eq.s32.totalorder %s26, 1
      %p252 = por %p250, %p251
      %p254 = scmp.ne.s32.totalorder %s237, %s253
      %p255 = scmp.eq.s32.totalorder %s26, 0
      %p256 = por %p254, %p255
      %p257 = scmp.le.s32.totalorder 1, %s20
      %p258 = scmp.lt.s32.totalorder %s20, 3
      %p259 = pnand %p257, %p258
      %p260 = pneg %p259
      // Predicated region
      $region9: #{tpu_custom_call.1} parent=5 // pred_check
        _
      $region10: #{tpu_custom_call.1} parent=5 // pred_check_branch
        %262 = sbr.rel (%p259) target = $region12
      $region11: #{tpu_custom_call.1} parent=5 // pred_region
        %s263 = ssub.s32 %s20, 1
        // Predicated region
        $region13: #{tpu_custom_call.1} parent=11 // pred_check
          %p264 = pneg %p81
        $region14: #{tpu_custom_call.1} parent=11 // pred_check_branch
          %266 = sbr.rel (%p264) target = $region16
        $region15: #{tpu_custom_call.1} parent=11 // pred_region
          %268 = vsyncadd [#allocation5], 0
          %s270 = sshll.u32 %s1, 4
          %s271 = int_to_ptr.hbm [resolvable:$true] %s270
          %s272 = sshll.u32 [#allocation4], 4
          %s273 = int_to_ptr.vmem [resolvable:$true] %s272
          %275 = dma.hbm_to_vmem [thread:$0]  %s271, 16, %s273, [#allocation5]
        $region16: #{tpu_custom_call.1} parent=11 // pred_fallthru
          _
        // Predicated region
        $region17: #{tpu_custom_call.1} parent=11 // pred_check
          %p276 = pneg %p102
        $region18: #{tpu_custom_call.1} parent=11 // pred_check_branch
          %278 = sbr.rel (%p276) target = $region20
        $region19: #{tpu_custom_call.1} parent=11 // pred_region
          _
        $region20: #{tpu_custom_call.1} parent=11 // pred_fallthru
          _
        // Predicated region
        $region21: #{tpu_custom_call.1} parent=11 // pred_check
          %p279 = pneg %p123
        $region22: #{tpu_custom_call.1} parent=11 // pred_check_branch
          %281 = sbr.rel (%p279) target = $region24
        $region23: #{tpu_custom_call.1} parent=11 // pred_region
          %283 = vsyncadd [#allocation5], 0
          %s284 = sshll.u32 %s3, 4
          %s285 = int_to_ptr.hbm [resolvable:$true] %s284
          %s286 = sshll.u32 [#allocation6], 4
          %s287 = int_to_ptr.vmem [resolvable:$true] %s286
          %292 = dma.hbm_to_vmem [thread:$0]  %s285, 256, %s287, [#allocation5], 64, 64, 4
        $region24: #{tpu_custom_call.1} parent=11 // pred_fallthru
          _
        // Predicated region
        $region25: #{tpu_custom_call.1} parent=11 // pred_check
          %p293 = pneg %p144
        $region26: #{tpu_custom_call.1} parent=11 // pred_check_branch
          %295 = sbr.rel (%p293) target = $region28
        $region27: #{tpu_custom_call.1} parent=11 // pred_region
          %297 = vsyncadd [#allocation8], 0
          %s298 = sshll.u32 %s4, 4
          %s299 = int_to_ptr.hbm [resolvable:$true] %s298
          %s300 = sshll.u32 [#allocation7], 4
          %s301 = int_to_ptr.vmem [resolvable:$true] %s300
          %306 = dma.hbm_to_vmem [thread:$0]  %s299, 256, %s301, [#allocation8], 64, 64, 4
        $region28: #{tpu_custom_call.1} parent=11 // pred_fallthru
          _
        // Predicated region
        $region29: #{tpu_custom_call.1} parent=11 // pred_check
          %p307 = pneg %p165
        $region30: #{tpu_custom_call.1} parent=11 // pred_check_branch
          %309 = sbr.rel (%p307) target = $region32
        $region31: #{tpu_custom_call.1} parent=11 // pred_region
          %311 = vsyncadd [#allocation8], 0
          %s312 = sshll.u32 %s5, 4
          %s313 = int_to_ptr.hbm [resolvable:$true] %s312
          %s314 = sshll.u32 [#allocation9], 4
          %s315 = int_to_ptr.vmem [resolvable:$true] %s314
          %320 = dma.hbm_to_vmem [thread:$0]  %s313, 256, %s315, [#allocation8], 64, 64, 4
        $region32: #{tpu_custom_call.1} parent=11 // pred_fallthru
          _
      $region12: #{tpu_custom_call.1} parent=5 // pred_fallthru
        _
      %p321 = scmp.lt.s32.totalorder %s20, 2
      // Predicated region
      $region33: #{tpu_custom_call.1} parent=5 // pred_check
        %p322 = pneg %p321
      $region34: #{tpu_custom_call.1} parent=5 // pred_check_branch
        %324 = sbr.rel (%p322) target = $region36
      $region35: #{tpu_custom_call.1} parent=5 // pred_region
        // Predicated region
        $region37: #{tpu_custom_call.1} parent=35 // pred_check
          %p325 = pneg %p54
        $region38: #{tpu_custom_call.1} parent=35 // pred_check_branch
          %327 = sbr.rel (%p325) target = $region40
        $region39: #{tpu_custom_call.1} parent=35 // pred_region
          %s328 = sand.u32 %s44, 1
          %s329 = scalar_lea.sflag [#allocation3], %s328
          %s330 = sand.u32 %s44, 1
          %s331 = smul.addr %s330, 16
          %s332 = scalar_lea.vmem [#allocation2], %s331
          %s333 = smul.u32 2, %s28
          %335 = vsyncadd %s329, 0
          %s336 = smul.addr %s27, 2
          %s337 = sadd.s32 %s333, %s336
          %s338 = smul.addr %s337, 8
          %s339 = scalar_lea.hbm %s0, %s338
          %s340 = sshll.u32 %s339, 4
          %s341 = int_to_ptr.hbm [resolvable:$true] %s340
          %s342 = sshll.u32 %s332, 4
          %s343 = int_to_ptr.vmem [resolvable:$true] %s342
          %348 = dma.hbm_to_vmem [thread:$0]  %s341, 256, %s343, %s329, 128, 128, 8
        $region40: #{tpu_custom_call.1} parent=35 // pred_fallthru
          _
      $region36: #{tpu_custom_call.1} parent=5 // pred_fallthru
        _
      %p349 = scmp.le.s32.totalorder 1, %s20
      %p350 = scmp.lt.s32.totalorder %s20, 3
      %p351 = pnand %p349, %p350
      %p352 = pneg %p351
      // Predicated region
      $region41: #{tpu_custom_call.1} parent=5 // pred_check
        _
      $region42: #{tpu_custom_call.1} parent=5 // pred_check_branch
        %354 = sbr.rel (%p351) target = $region44
      $region43: #{tpu_custom_call.1} parent=5 // pred_region
        %s355 = ssub.s32 %s20, 1
        %s356 = sand.u32 %s47, 1
        %s357 = scalar_lea.sflag [#allocation3], %s356
        %s358 = sand.u32 %s47, 1
        %s359 = smul.addr %s358, 16
        %s360 = scalar_lea.vmem [#allocation2], %s359
        // Predicated region
        $region45: #{tpu_custom_call.1} parent=43 // pred_check
          %p361 = pneg %p60
        $region46: #{tpu_custom_call.1} parent=43 // pred_check_branch
          %363 = sbr.rel (%p361) target = $region48
        $region47: #{tpu_custom_call.1} parent=43 // pred_region
          %365 = dma.done %s357, 256
        $region48: #{tpu_custom_call.1} parent=43 // pred_fallthru
          _
        // Predicated region
        $region49: #{tpu_custom_call.1} parent=43 // pred_check
          %p366 = pneg %p81
        $region50: #{tpu_custom_call.1} parent=43 // pred_check_branch
          %368 = sbr.rel (%p366) target = $region52
        $region51: #{tpu_custom_call.1} parent=43 // pred_region
          %370 = dma.done [#allocation5], 16
        $region52: #{tpu_custom_call.1} parent=43 // pred_fallthru
          _
        // Predicated region
        $region53: #{tpu_custom_call.1} parent=43 // pred_check
          %p371 = pneg %p123
        $region54: #{tpu_custom_call.1} parent=43 // pred_check_branch
          %373 = sbr.rel (%p371) target = $region56
        $region55: #{tpu_custom_call.1} parent=43 // pred_region
          %375 = dma.done [#allocation5], 256
        $region56: #{tpu_custom_call.1} parent=43 // pred_fallthru
          _
        // Predicated region
        $region57: #{tpu_custom_call.1} parent=43 // pred_check
          %p376 = pneg %p144
        $region58: #{tpu_custom_call.1} parent=43 // pred_check_branch
          %378 = sbr.rel (%p376) target = $region60
        $region59: #{tpu_custom_call.1} parent=43 // pred_region
          %380 = dma.done [#allocation8], 256
        $region60: #{tpu_custom_call.1} parent=43 // pred_fallthru
          _
        // Predicated region
        $region61: #{tpu_custom_call.1} parent=43 // pred_check
          %p381 = pneg %p165
        $region62: #{tpu_custom_call.1} parent=43 // pred_check_branch
          %383 = sbr.rel (%p381) target = $region64
        $region63: #{tpu_custom_call.1} parent=43 // pred_region
          %385 = dma.done [#allocation8], 256
        $region64: #{tpu_custom_call.1} parent=43 // pred_fallthru
          _
        %s386 = sand.u32 %s47, 1
        %s387 = scalar_lea.sflag [#allocation3], %s386
        %s388 = sand.u32 %s47, 1
        %s389 = smul.addr %s388, 16
        %s390 = scalar_lea.vmem [#allocation2], %s389
        %p391 = pneg %p60
        %p392 = pneg %p57
        %p393 = pneg %p81
        %p394 = pneg %p78
        %p395 = pneg %p102
        %p396 = pneg %p99
        %p397 = pneg %p123
        %p398 = pneg %p120
        %p399 = pneg %p144
        %p400 = pneg %p141
        %p401 = pneg %p165
        %p402 = pneg %p162
        %p403 = pneg %p193
        %p404 = pneg %p190
        %s405 = smul.u32 2, %s30
        %p406 = scmp.lt.s32.totalorder %s29, 1
        %s407 = scalar_select %p406, %s29, 1
        %p408 = scmp.lt.s32.totalorder %s405, 1
        %s409 = scalar_select %p408, %s405, 1
        %s410 = smul.addr %s407, 8
        %s411 = sadd.s32 %s409, %s410
        %s412 = smul.addr %s411, 4
        %s413 = scalar_lea.vmem %s6, %s412
        %p414 = pneg %p221
        %p415 = pneg %p218
        %s416 = smul.u32 2, %s30
        %p417 = scmp.lt.s32.totalorder %s29, 1
        %s418 = scalar_select %p417, %s29, 1
        %p419 = scmp.lt.s32.totalorder %s416, 1
        %s420 = scalar_select %p419, %s416, 1
        %s421 = smul.addr %s418, 8
        %s422 = sadd.s32 %s420, %s421
        %s423 = smul.addr %s422, 4
        %s424 = scalar_lea.vmem %s7, %s423
        %p425 = pneg %p249
        %p426 = pneg %p246
        %s427 = smul.u32 2, %s30
        %p428 = scmp.lt.s32.totalorder %s29, 1
        %s429 = scalar_select %p428, %s29, 1
        %p430 = scmp.lt.s32.totalorder %s427, 1
        %s431 = scalar_select %p430, %s427, 1
        %s432 = smul.addr %s429, 8
        %s433 = sadd.s32 %s431, %s432
        %s434 = smul.addr %s433, 4
        %s435 = scalar_lea.vmem %s8, %s434
        %s436 = smul.u32 2, %s30
        %s437 = smul.u32 2, %s30
        %p438 = scmp.lt.s32.totalorder %s29, 1
        %s439 = scalar_select %p438, %s29, 1
        %p440 = scmp.lt.s32.totalorder %s437, 1
        %s441 = scalar_select %p440, %s437, 1
        %s442 = smul.addr %s439, 8
        %s443 = sadd.s32 %s441, %s442
        %s444 = smul.addr %s443, 4
        %s445 = scalar_lea.vmem %s6, %s444
        %s446 = smul.u32 2, %s30
        %s447 = smul.u32 2, %s30
        %p448 = scmp.lt.s32.totalorder %s29, 1
        %s449 = scalar_select %p448, %s29, 1
        %p450 = scmp.lt.s32.totalorder %s447, 1
        %s451 = scalar_select %p450, %s447, 1
        %s452 = smul.addr %s449, 8
        %s453 = sadd.s32 %s451, %s452
        %s454 = smul.addr %s453, 4
        %s455 = scalar_lea.vmem %s7, %s454
        %s456 = smul.u32 2, %s30
        %s457 = smul.u32 2, %s30
        %p458 = scmp.lt.s32.totalorder %s29, 1
        %s459 = scalar_select %p458, %s29, 1
        %p460 = scmp.lt.s32.totalorder %s457, 1
        %s461 = scalar_select %p460, %s457, 1
        %s462 = smul.addr %s459, 8
        %s463 = sadd.s32 %s461, %s462
        %s464 = smul.addr %s463, 4
        %s465 = scalar_lea.vmem %s8, %s464
        %s466 = smul.u32 2, %s30
        %v468 = vld [vmem:[%s360] sm:$0xff]
        %v469 = vld [vmem:[%s360 + $0x8] sm:$0xff]
        %v470 = vld [vmem:[#allocation4] sm:$0x1]
        %v471 = vld [vmem:[%s2] sm:$0x1]
        %vm472 = vcmask 261120
        %v473 = vsel %vm472, %v468, 0.0
        %474 = vadd.xlane.f32.xlu0 %v473
        %v475 = vpop.xlane.xlu0 %474
        %v476 = vsel %vm472, %v469, 0.0
        %477 = vadd.xlane.f32.xlu0 %v476
        %v478 = vpop.xlane.xlu0 %477
        %v479 = vrcp.pop 32.0
        %v480 = vmul.f32 32.0, %v479
        %v481 = vsub.f32 1.0, %v480
        %v482 = vmul.f32 %v479, %v481
        %v483 = vadd.f32 %v479, %v482
        %vm484 = vweird.f32 %v479
        %v485 = vsel %vm484, %v479, %v483
        %v486 = vmul.f32 %v475, %v485
        %v487 = vmul.f32 %v478, %v485
        %v488 = vsub.f32 %v468, %v486
        %v489 = vsub.f32 %v469, %v487
        %v490 = vmul.f32 %v488, %v488
        %v491 = vmul.f32 %v489, %v489
        %v492 = vsel %vm472, %v490, 0.0
        %493 = vadd.xlane.f32.xlu0 %v492
        %v494 = vpop.xlane.xlu0 %493
        %v495 = vsel %vm472, %v491, 0.0
        %496 = vadd.xlane.f32.xlu0 %v495
        %v497 = vpop.xlane.xlu0 %496
        %v498 = vmul.f32 %v494, %v485
        %v499 = vmul.f32 %v497, %v485
        %v500 = vadd.f32 %v498, 1e-05
        %v501 = vadd.f32 %v499, 1e-05
        %v502 = vrsqrt.pop %v500
        %v503 = vmul.f32 %v502, %v500
        %v504 = vmul.f32 %v503, %v502
        %v505 = vmul.f32 0.5, %v504
        %v506 = vsub.f32 1.5, %v505
        %v507 = vmul.f32 %v502, %v506
        %vm508 = vweird.f32 %v500
        %vm509 = vweird.f32 %v502
        %vm510 = vmor %vm508, %vm509
        %v511 = vsel %vm510, %v502, %v507
        %v512 = vrsqrt.pop %v501
        %v513 = vmul.f32 %v512, %v501
        %v514 = vmul.f32 %v513, %v512
        %v515 = vmul.f32 0.5, %v514
        %v516 = vsub.f32 1.5, %v515
        %v517 = vmul.f32 %v512, %v516
        %vm518 = vweird.f32 %v501
        %vm519 = vweird.f32 %v512
        %vm520 = vmor %vm518, %vm519
        %v521 = vsel %vm520, %v512, %v517
        %v522 = vmul.f32 %v488, %v511
        %v523 = vmul.f32 %v489, %v521
        %v525 = vperm.slane %v470, 0
        %v527 = vmul.f32 %v522, %v525
        %v528 = vmul.f32 %v523, %v525
        %v530 = vperm.slane %v471, 0
        %v532 = vadd.f32 %v527, %v530
        %v533 = vadd.f32 %v528, %v530
        %v534 = vpack.c.bf16 %v533, %v532
        %v535 = vld [vmem:[#allocation6] sm:$0xf]
        %v536 = vld [vmem:[#allocation6 + $0x4] sm:$0xf]
        %v537 = vld [vmem:[#allocation6 + $0x8] sm:$0xf]
        %v538 = vld [vmem:[#allocation6 + $0xc] sm:$0xf]
        %v543 = vunpack.c.l.b16 %v535
        %v544 = vunpack.c.l.b16 %v536
        %v545 = vunpack.c.l.b16 %v537
        %v546 = vunpack.c.l.b16 %v538
        %v547 = vpack.c.b16 %v544, %v543
        %v548 = vpack.c.b16 %v546, %v545
        %v552 = vsel %vm472, %v534, 0
        %554 = vmatpush.bf16.msra.mxu0 0
        %555 = vmatpush.bf16.msra.mxu0 0
        %556 = vmatpush.bf16.msra.mxu0 0
        %557 = vmatpush.bf16.msra.mxu0 0
        %558 = vmatpush.bf16.msra.mxu0 0
        %559 = vmatpush.bf16.msra.mxu0 0
        %560 = vmatpush.bf16.msra.mxu0 %v548
        %561 = vmatpush.bf16.msra.mxu0 %v547
        %562 = vmatmul.bf16.gmra.mxu0 %v552
        %v563 = vpop.f32.mrf.mxu0
        %v564 = vadd.f32 0.0, %v563
        %v565 = vpop.f32.mrf.mxu0
        %v566 = vadd.f32 0.0, %v565
        %567 = vdwg.mxu0
        %v568 = vpack.c.bf16 %v564, %v564
        %v569 = vpack.c.bf16 %v566, %v566
        %v570 = vld [vmem:[#allocation7] sm:$0xf]
        %v571 = vld [vmem:[#allocation7 + $0x4] sm:$0xf]
        %v572 = vld [vmem:[#allocation7 + $0x8] sm:$0xf]
        %v573 = vld [vmem:[#allocation7 + $0xc] sm:$0xf]
        %v578 = vunpack.c.l.b16 %v570
        %v579 = vunpack.c.l.b16 %v571
        %v580 = vunpack.c.l.b16 %v572
        %v581 = vunpack.c.l.b16 %v573
        %v582 = vpack.c.b16 %v579, %v578
        %v583 = vpack.c.b16 %v581, %v580
        %586 = vmatpush.bf16.msra.mxu0 0
        %587 = vmatpush.bf16.msra.mxu0 0
        %588 = vmatpush.bf16.msra.mxu0 0
        %589 = vmatpush.bf16.msra.mxu0 0
        %590 = vmatpush.bf16.msra.mxu0 0
        %591 = vmatpush.bf16.msra.mxu0 0
        %592 = vmatpush.bf16.msra.mxu0 %v583
        %593 = vmatpush.bf16.msra.mxu0 %v582
        %594 = vmatmul.bf16.gmra.mxu0 %v552
        %v595 = vpop.f32.mrf.mxu0
        %v596 = vadd.f32 0.0, %v595
        %v597 = vpop.f32.mrf.mxu0
        %v598 = vadd.f32 0.0, %v597
        %599 = vdwg.mxu0
        %v600 = vpack.c.bf16 %v596, %v596
        %v601 = vpack.c.bf16 %v598, %v598
        %v602 = vld [vmem:[#allocation9] sm:$0xf]
        %v603 = vld [vmem:[#allocation9 + $0x4] sm:$0xf]
        %v604 = vld [vmem:[#allocation9 + $0x8] sm:$0xf]
        %v605 = vld [vmem:[#allocation9 + $0xc] sm:$0xf]
        %v610 = vunpack.c.l.b16 %v602
        %v611 = vunpack.c.l.b16 %v603
        %v612 = vunpack.c.l.b16 %v604
        %v613 = vunpack.c.l.b16 %v605
        %v614 = vpack.c.b16 %v611, %v610
        %v615 = vpack.c.b16 %v613, %v612
        %618 = vmatpush.bf16.msra.mxu0 0
        %619 = vmatpush.bf16.msra.mxu0 0
        %620 = vmatpush.bf16.msra.mxu0 0
        %621 = vmatpush.bf16.msra.mxu0 0
        %622 = vmatpush.bf16.msra.mxu0 0
        %623 = vmatpush.bf16.msra.mxu0 0
        %624 = vmatpush.bf16.msra.mxu0 %v615
        %625 = vmatpush.bf16.msra.mxu0 %v614
        %626 = vmatmul.bf16.gmra.mxu0 %v552
        %v627 = vpop.f32.mrf.mxu0
        %v628 = vadd.f32 0.0, %v627
        %v629 = vpop.f32.mrf.mxu0
        %v630 = vadd.f32 0.0, %v629
        %631 = vdwg.mxu0
        %v632 = vpack.c.bf16 %v628, %v628
        %v633 = vpack.c.bf16 %v630, %v630
        %636 = vrot.lane.b32.xlu0 %v568, 120
        %v637 = vpop.permute.xlu0 %636
        %638 = vrot.lane.b32.xlu0 %v569, 120
        %v639 = vpop.permute.xlu0 %638
        %640 = vrot.lane.b32.xlu0 %v568, 112
        %v641 = vpop.permute.xlu0 %640
        %642 = vrot.lane.b32.xlu0 %v569, 112
        %v643 = vpop.permute.xlu0 %642
        %644 = vrot.lane.b32.xlu0 %v568, 104
        %v645 = vpop.permute.xlu0 %644
        %646 = vrot.lane.b32.xlu0 %v569, 104
        %v647 = vpop.permute.xlu0 %646
        %v650 = vpack.i.b16 %v637, %v568
        %v651 = vshrl.u32 %v568, 16
        %v652 = vshrl.u32 %v637, 16
        %v653 = vpack.i.b16 %v652, %v651
        %v656 = vpack.i.b16 %v645, %v641
        %v657 = vshrl.u32 %v641, 16
        %v658 = vshrl.u32 %v645, 16
        %v659 = vpack.i.b16 %v658, %v657
        %v662 = vpack.i.b16 %v639, %v569
        %v663 = vshrl.u32 %v569, 16
        %v664 = vshrl.u32 %v639, 16
        %v665 = vpack.i.b16 %v664, %v663
        %v668 = vpack.i.b16 %v647, %v643
        %v669 = vshrl.u32 %v643, 16
        %v670 = vshrl.u32 %v647, 16
        %v671 = vpack.i.b16 %v670, %v669
        %v674 = vunpack.c.l.s4 1983009808
        %v675 = vunpack.c.0.s8 %v674
        %v676 = vperm.slane %v650, %v675
        %v679 = vunpack.c.l.s4 1983009808
        %v680 = vunpack.c.0.s8 %v679
        %v681 = vperm.slane %v656, %v680
        %v682 = vrot.slane %v681, 4
        %vm683 = vcmask 1047556
        %v684 = vsel %vm683, %v682, %v676
        %v685 = vrot.slane %v676, 4
        %v686 = vsel %vm683, %v681, %v685
        %v688 = vunpack.c.l.s4 1934713408
        %v689 = vunpack.c.0.s8 %v688
        %v690 = vperm.slane %v684, %v689
        %v692 = vunpack.c.l.s4 1934713408
        %v693 = vunpack.c.0.s8 %v692
        %v694 = vperm.slane %v686, %v693
        %v695 = vrot.slane %v690, 4
        %v696 = vsel %vm683, 0, %v695
        %v697 = vrot.slane %v694, 4
        %v698 = vsel %vm683, 0, %v697
        %v701 = vunpack.c.l.s4 1983009808
        %v702 = vunpack.c.0.s8 %v701
        %v703 = vperm.slane %v653, %v702
        %v706 = vunpack.c.l.s4 1983009808
        %v707 = vunpack.c.0.s8 %v706
        %v708 = vperm.slane %v659, %v707
        %v709 = vrot.slane %v708, 4
        %v710 = vsel %vm683, %v709, %v703
        %v711 = vrot.slane %v703, 4
        %v712 = vsel %vm683, %v708, %v711
        %v714 = vunpack.c.l.s4 1934713408
        %v715 = vunpack.c.0.s8 %v714
        %v716 = vperm.slane %v710, %v715
        %v718 = vunpack.c.l.s4 1934713408
        %v719 = vunpack.c.0.s8 %v718
        %v720 = vperm.slane %v712, %v719
        %v721 = vrot.slane %v716, 4
        %v722 = vsel %vm683, 0, %v721
        %v723 = vrot.slane %v720, 4
        %v724 = vsel %vm683, 0, %v723
        %v727 = vunpack.c.l.s4 1983009808
        %v728 = vunpack.c.0.s8 %v727
        %v729 = vperm.slane %v662, %v728
        %v732 = vunpack.c.l.s4 1983009808
        %v733 = vunpack.c.0.s8 %v732
        %v734 = vperm.slane %v668, %v733
        %v735 = vrot.slane %v734, 4
        %v736 = vsel %vm683, %v735, %v729
        %v737 = vrot.slane %v729, 4
        %v738 = vsel %vm683, %v734, %v737
        %v740 = vunpack.c.l.s4 1934713408
        %v741 = vunpack.c.0.s8 %v740
        %v742 = vperm.slane %v736, %v741
        %v744 = vunpack.c.l.s4 1934713408
        %v745 = vunpack.c.0.s8 %v744
        %v746 = vperm.slane %v738, %v745
        %v747 = vrot.slane %v742, 4
        %v748 = vsel %vm683, 0, %v747
        %v749 = vrot.slane %v746, 4
        %v750 = vsel %vm683, 0, %v749
        %v753 = vunpack.c.l.s4 1983009808
        %v754 = vunpack.c.0.s8 %v753
        %v755 = vperm.slane %v665, %v754
        %v758 = vunpack.c.l.s4 1983009808
        %v759 = vunpack.c.0.s8 %v758
        %v760 = vperm.slane %v671, %v759
        %v761 = vrot.slane %v760, 4
        %v762 = vsel %vm683, %v761, %v755
        %v763 = vrot.slane %v755, 4
        %v764 = vsel %vm683, %v760, %v763
        %v766 = vunpack.c.l.s4 1934713408
        %v767 = vunpack.c.0.s8 %v766
        %v768 = vperm.slane %v762, %v767
        %v770 = vunpack.c.l.s4 1934713408
        %v771 = vunpack.c.0.s8 %v770
        %v772 = vperm.slane %v764, %v771
        %v773 = vrot.slane %v768, 4
        %v774 = vsel %vm683, 0, %v773
        %v775 = vrot.slane %v772, 4
        %v776 = vsel %vm683, 0, %v775
        %v777 = vsel %vm683, %v697, %v690
        %v779 = vunpack.c.l.s4 1983009808
        %v780 = vunpack.c.0.s8 %v779
        %v781 = vperm.slane %v777, %v780
        %v782 = vrot.slane %v698, 4
        %v783 = vsel %vm683, %v782, %v696
        %v785 = vunpack.c.l.s4 1983009808
        %v786 = vunpack.c.0.s8 %v785
        %v787 = vperm.slane %v783, %v786
        %v788 = vrot.slane %v787, 4
        %v789 = vsel %vm683, %v788, %v781
        %v791 = vunpack.c.l.s4 1934713408
        %v792 = vunpack.c.0.s8 %v791
        %v793 = vperm.slane %v789, %v792
        %v794 = vrot.slane %v793, 4
        %v795 = vsel %vm683, 0, %v794
        %v796 = vsel %vm683, %v723, %v716
        %v798 = vunpack.c.l.s4 1983009808
        %v799 = vunpack.c.0.s8 %v798
        %v800 = vperm.slane %v796, %v799
        %v801 = vrot.slane %v724, 4
        %v802 = vsel %vm683, %v801, %v722
        %v804 = vunpack.c.l.s4 1983009808
        %v805 = vunpack.c.0.s8 %v804
        %v806 = vperm.slane %v802, %v805
        %v807 = vrot.slane %v806, 4
        %v808 = vsel %vm683, %v807, %v800
        %v810 = vunpack.c.l.s4 1934713408
        %v811 = vunpack.c.0.s8 %v810
        %v812 = vperm.slane %v808, %v811
        %v813 = vrot.slane %v812, 4
        %v814 = vsel %vm683, 0, %v813
        %v815 = vsel %vm683, %v749, %v742
        %v817 = vunpack.c.l.s4 1983009808
        %v818 = vunpack.c.0.s8 %v817
        %v819 = vperm.slane %v815, %v818
        %v820 = vrot.slane %v750, 4
        %v821 = vsel %vm683, %v820, %v748
        %v823 = vunpack.c.l.s4 1983009808
        %v824 = vunpack.c.0.s8 %v823
        %v825 = vperm.slane %v821, %v824
        %v826 = vrot.slane %v825, 4
        %v827 = vsel %vm683, %v826, %v819
        %v829 = vunpack.c.l.s4 1934713408
        %v830 = vunpack.c.0.s8 %v829
        %v831 = vperm.slane %v827, %v830
        %v832 = vrot.slane %v831, 4
        %v833 = vsel %vm683, 0, %v832
        %v834 = vsel %vm683, %v775, %v768
        %v836 = vunpack.c.l.s4 1983009808
        %v837 = vunpack.c.0.s8 %v836
        %v838 = vperm.slane %v834, %v837
        %v839 = vrot.slane %v776, 4
        %v840 = vsel %vm683, %v839, %v774
        %v842 = vunpack.c.l.s4 1983009808
        %v843 = vunpack.c.0.s8 %v842
        %v844 = vperm.slane %v840, %v843
        %v845 = vrot.slane %v844, 4
        %v846 = vsel %vm683, %v845, %v838
        %v848 = vunpack.c.l.s4 1934713408
        %v849 = vunpack.c.0.s8 %v848
        %v850 = vperm.slane %v846, %v849
        %v851 = vrot.slane %v850, 4
        %v852 = vsel %vm683, 0, %v851
        %v855 = vpack.i.b16 %v812, %v793
        %v857 = vshrl.u32 %v793, 16
        %v858 = vshrl.u32 %v812, 16
        %v859 = vpack.i.b16 %v858, %v857
        %v863 = vpack.i.b16 %v814, %v795
        %v865 = vshrl.u32 %v795, 16
        %v866 = vshrl.u32 %v814, 16
        %v867 = vpack.i.b16 %v866, %v865
        %v871 = vpack.i.b16 %v850, %v831
        %v873 = vshrl.u32 %v831, 16
        %v874 = vshrl.u32 %v850, 16
        %v875 = vpack.i.b16 %v874, %v873
        %v879 = vpack.i.b16 %v852, %v833
        %v881 = vshrl.u32 %v833, 16
        %v882 = vshrl.u32 %v852, 16
        %v883 = vpack.i.b16 %v882, %v881
        %vm885 = vcmask 60416
        %886 = vst.msk [vmem:[%s445] sm:$0xf] %vm885, %v855
        %887 = vst.msk [vmem:[%s445 + $0x4] sm:$0xf] %vm885, %v871
        %888 = vst.msk [vmem:[%s445 + $0x8] sm:$0xf] %vm885, %v859
        %889 = vst.msk [vmem:[%s445 + $0xc] sm:$0xf] %vm885, %v875
        %890 = vst.msk [vmem:[%s445 + $0x10] sm:$0xf] %vm885, %v863
        %891 = vst.msk [vmem:[%s445 + $0x14] sm:$0xf] %vm885, %v879
        %892 = vst.msk [vmem:[%s445 + $0x18] sm:$0xf] %vm885, %v867
        %893 = vst.msk [vmem:[%s445 + $0x1c] sm:$0xf] %vm885, %v883
        %896 = vrot.lane.b32.xlu0 %v600, 120
        %v897 = vpop.permute.xlu0 %896
        %898 = vrot.lane.b32.xlu0 %v601, 120
        %v899 = vpop.permute.xlu0 %898
        %900 = vrot.lane.b32.xlu0 %v600, 112
        %v901 = vpop.permute.xlu0 %900
        %902 = vrot.lane.b32.xlu0 %v601, 112
        %v903 = vpop.permute.xlu0 %902
        %904 = vrot.lane.b32.xlu0 %v600, 104
        %v905 = vpop.permute.xlu0 %904
        %906 = vrot.lane.b32.xlu0 %v601, 104
        %v907 = vpop.permute.xlu0 %906
        %v910 = vpack.i.b16 %v897, %v600
        %v911 = vshrl.u32 %v600, 16
        %v912 = vshrl.u32 %v897, 16
        %v913 = vpack.i.b16 %v912, %v911
        %v916 = vpack.i.b16 %v905, %v901
        %v917 = vshrl.u32 %v901, 16
        %v918 = vshrl.u32 %v905, 16
        %v919 = vpack.i.b16 %v918, %v917
        %v922 = vpack.i.b16 %v899, %v601
        %v923 = vshrl.u32 %v601, 16
        %v924 = vshrl.u32 %v899, 16
        %v925 = vpack.i.b16 %v924, %v923
        %v928 = vpack.i.b16 %v907, %v903
        %v929 = vshrl.u32 %v903, 16
        %v930 = vshrl.u32 %v907, 16
        %v931 = vpack.i.b16 %v930, %v929
        %v934 = vunpack.c.l.s4 1983009808
        %v935 = vunpack.c.0.s8 %v934
        %v936 = vperm.slane %v910, %v935
        %v939 = vunpack.c.l.s4 1983009808
        %v940 = vunpack.c.0.s8 %v939
        %v941 = vperm.slane %v916, %v940
        %v942 = vrot.slane %v941, 4
        %v943 = vsel %vm683, %v942, %v936
        %v944 = vrot.slane %v936, 4
        %v945 = vsel %vm683, %v941, %v944
        %v947 = vunpack.c.l.s4 1934713408
        %v948 = vunpack.c.0.s8 %v947
        %v949 = vperm.slane %v943, %v948
        %v951 = vunpack.c.l.s4 1934713408
        %v952 = vunpack.c.0.s8 %v951
        %v953 = vperm.slane %v945, %v952
        %v954 = vrot.slane %v949, 4
        %v955 = vsel %vm683, 0, %v954
        %v956 = vrot.slane %v953, 4
        %v957 = vsel %vm683, 0, %v956
        %v960 = vunpack.c.l.s4 1983009808
        %v961 = vunpack.c.0.s8 %v960
        %v962 = vperm.slane %v913, %v961
        %v965 = vunpack.c.l.s4 1983009808
        %v966 = vunpack.c.0.s8 %v965
        %v967 = vperm.slane %v919, %v966
        %v968 = vrot.slane %v967, 4
        %v969 = vsel %vm683, %v968, %v962
        %v970 = vrot.slane %v962, 4
        %v971 = vsel %vm683, %v967, %v970
        %v973 = vunpack.c.l.s4 1934713408
        %v974 = vunpack.c.0.s8 %v973
        %v975 = vperm.slane %v969, %v974
        %v977 = vunpack.c.l.s4 1934713408
        %v978 = vunpack.c.0.s8 %v977
        %v979 = vperm.slane %v971, %v978
        %v980 = vrot.slane %v975, 4
        %v981 = vsel %vm683, 0, %v980
        %v982 = vrot.slane %v979, 4
        %v983 = vsel %vm683, 0, %v982
        %v986 = vunpack.c.l.s4 1983009808
        %v987 = vunpack.c.0.s8 %v986
        %v988 = vperm.slane %v922, %v987
        %v991 = vunpack.c.l.s4 1983009808
        %v992 = vunpack.c.0.s8 %v991
        %v993 = vperm.slane %v928, %v992
        %v994 = vrot.slane %v993, 4
        %v995 = vsel %vm683, %v994, %v988
        %v996 = vrot.slane %v988, 4
        %v997 = vsel %vm683, %v993, %v996
        %v999 = vunpack.c.l.s4 1934713408
        %v1000 = vunpack.c.0.s8 %v999
        %v1001 = vperm.slane %v995, %v1000
        %v1003 = vunpack.c.l.s4 1934713408
        %v1004 = vunpack.c.0.s8 %v1003
        %v1005 = vperm.slane %v997, %v1004
        %v1006 = vrot.slane %v1001, 4
        %v1007 = vsel %vm683, 0, %v1006
        %v1008 = vrot.slane %v1005, 4
        %v1009 = vsel %vm683, 0, %v1008
        %v1012 = vunpack.c.l.s4 1983009808
        %v1013 = vunpack.c.0.s8 %v1012
        %v1014 = vperm.slane %v925, %v1013
        %v1017 = vunpack.c.l.s4 1983009808
        %v1018 = vunpack.c.0.s8 %v1017
        %v1019 = vperm.slane %v931, %v1018
        %v1020 = vrot.slane %v1019, 4
        %v1021 = vsel %vm683, %v1020, %v1014
        %v1022 = vrot.slane %v1014, 4
        %v1023 = vsel %vm683, %v1019, %v1022
        %v1025 = vunpack.c.l.s4 1934713408
        %v1026 = vunpack.c.0.s8 %v1025
        %v1027 = vperm.slane %v1021, %v1026
        %v1029 = vunpack.c.l.s4 1934713408
        %v1030 = vunpack.c.0.s8 %v1029
        %v1031 = vperm.slane %v1023, %v1030
        %v1032 = vrot.slane %v1027, 4
        %v1033 = vsel %vm683, 0, %v1032
        %v1034 = vrot.slane %v1031, 4
        %v1035 = vsel %vm683, 0, %v1034
        %v1036 = vsel %vm683, %v956, %v949
        %v1038 = vunpack.c.l.s4 1983009808
        %v1039 = vunpack.c.0.s8 %v1038
        %v1040 = vperm.slane %v1036, %v1039
        %v1041 = vrot.slane %v957, 4
        %v1042 = vsel %vm683, %v1041, %v955
        %v1044 = vunpack.c.l.s4 1983009808
        %v1045 = vunpack.c.0.s8 %v1044
        %v1046 = vperm.slane %v1042, %v1045
        %v1047 = vrot.slane %v1046, 4
        %v1048 = vsel %vm683, %v1047, %v1040
        %v1050 = vunpack.c.l.s4 1934713408
        %v1051 = vunpack.c.0.s8 %v1050
        %v1052 = vperm.slane %v1048, %v1051
        %v1053 = vrot.slane %v1052, 4
        %v1054 = vsel %vm683, 0, %v1053
        %v1055 = vsel %vm683, %v982, %v975
        %v1057 = vunpack.c.l.s4 1983009808
        %v1058 = vunpack.c.0.s8 %v1057
        %v1059 = vperm.slane %v1055, %v1058
        %v1060 = vrot.slane %v983, 4
        %v1061 = vsel %vm683, %v1060, %v981
        %v1063 = vunpack.c.l.s4 1983009808
        %v1064 = vunpack.c.0.s8 %v1063
        %v1065 = vperm.slane %v1061, %v1064
        %v1066 = vrot.slane %v1065, 4
        %v1067 = vsel %vm683, %v1066, %v1059
        %v1069 = vunpack.c.l.s4 1934713408
        %v1070 = vunpack.c.0.s8 %v1069
        %v1071 = vperm.slane %v1067, %v1070
        %v1072 = vrot.slane %v1071, 4
        %v1073 = vsel %vm683, 0, %v1072
        %v1074 = vsel %vm683, %v1008, %v1001
        %v1076 = vunpack.c.l.s4 1983009808
        %v1077 = vunpack.c.0.s8 %v1076
        %v1078 = vperm.slane %v1074, %v1077
        %v1079 = vrot.slane %v1009, 4
        %v1080 = vsel %vm683, %v1079, %v1007
        %v1082 = vunpack.c.l.s4 1983009808
        %v1083 = vunpack.c.0.s8 %v1082
        %v1084 = vperm.slane %v1080, %v1083
        %v1085 = vrot.slane %v1084, 4
        %v1086 = vsel %vm683, %v1085, %v1078
        %v1088 = vunpack.c.l.s4 1934713408
        %v1089 = vunpack.c.0.s8 %v1088
        %v1090 = vperm.slane %v1086, %v1089
        %v1091 = vrot.slane %v1090, 4
        %v1092 = vsel %vm683, 0, %v1091
        %v1093 = vsel %vm683, %v1034, %v1027
        %v1095 = vunpack.c.l.s4 1983009808
        %v1096 = vunpack.c.0.s8 %v1095
        %v1097 = vperm.slane %v1093, %v1096
        %v1098 = vrot.slane %v1035, 4
        %v1099 = vsel %vm683, %v1098, %v1033
        %v1101 = vunpack.c.l.s4 1983009808
        %v1102 = vunpack.c.0.s8 %v1101
        %v1103 = vperm.slane %v1099, %v1102
        %v1104 = vrot.slane %v1103, 4
        %v1105 = vsel %vm683, %v1104, %v1097
        %v1107 = vunpack.c.l.s4 1934713408
        %v1108 = vunpack.c.0.s8 %v1107
        %v1109 = vperm.slane %v1105, %v1108
        %v1110 = vrot.slane %v1109, 4
        %v1111 = vsel %vm683, 0, %v1110
        %v1114 = vpack.i.b16 %v1071, %v1052
        %v1116 = vshrl.u32 %v1052, 16
        %v1117 = vshrl.u32 %v1071, 16
        %v1118 = vpack.i.b16 %v1117, %v1116
        %v1122 = vpack.i.b16 %v1073, %v1054
        %v1124 = vshrl.u32 %v1054, 16
        %v1125 = vshrl.u32 %v1073, 16
        %v1126 = vpack.i.b16 %v1125, %v1124
        %v1130 = vpack.i.b16 %v1109, %v1090
        %v1132 = vshrl.u32 %v1090, 16
        %v1133 = vshrl.u32 %v1109, 16
        %v1134 = vpack.i.b16 %v1133, %v1132
        %v1138 = vpack.i.b16 %v1111, %v1092
        %v1140 = vshrl.u32 %v1092, 16
        %v1141 = vshrl.u32 %v1111, 16
        %v1142 = vpack.i.b16 %v1141, %v1140
        %1144 = vst.msk [vmem:[%s455] sm:$0xf] %vm885, %v1114
        %1145 = vst.msk [vmem:[%s455 + $0x4] sm:$0xf] %vm885, %v1130
        %1146 = vst.msk [vmem:[%s455 + $0x8] sm:$0xf] %vm885, %v1118
        %1147 = vst.msk [vmem:[%s455 + $0xc] sm:$0xf] %vm885, %v1134
        %1148 = vst.msk [vmem:[%s455 + $0x10] sm:$0xf] %vm885, %v1122
        %1149 = vst.msk [vmem:[%s455 + $0x14] sm:$0xf] %vm885, %v1138
        %1150 = vst.msk [vmem:[%s455 + $0x18] sm:$0xf] %vm885, %v1126
        %1151 = vst.msk [vmem:[%s455 + $0x1c] sm:$0xf] %vm885, %v1142
        %1154 = vrot.lane.b32.xlu0 %v632, 120
        %v1155 = vpop.permute.xlu0 %1154
        %1156 = vrot.lane.b32.xlu0 %v633, 120
        %v1157 = vpop.permute.xlu0 %1156
        %1158 = vrot.lane.b32.xlu0 %v632, 112
        %v1159 = vpop.permute.xlu0 %1158
        %1160 = vrot.lane.b32.xlu0 %v633, 112
        %v1161 = vpop.permute.xlu0 %1160
        %1162 = vrot.lane.b32.xlu0 %v632, 104
        %v1163 = vpop.permute.xlu0 %1162
        %1164 = vrot.lane.b32.xlu0 %v633, 104
        %v1165 = vpop.permute.xlu0 %1164
        %v1168 = vpack.i.b16 %v1155, %v632
        %v1169 = vshrl.u32 %v632, 16
        %v1170 = vshrl.u32 %v1155, 16
        %v1171 = vpack.i.b16 %v1170, %v1169
        %v1174 = vpack.i.b16 %v1163, %v1159
        %v1175 = vshrl.u32 %v1159, 16
        %v1176 = vshrl.u32 %v1163, 16
        %v1177 = vpack.i.b16 %v1176, %v1175
        %v1180 = vpack.i.b16 %v1157, %v633
        %v1181 = vshrl.u32 %v633, 16
        %v1182 = vshrl.u32 %v1157, 16
        %v1183 = vpack.i.b16 %v1182, %v1181
        %v1186 = vpack.i.b16 %v1165, %v1161
        %v1187 = vshrl.u32 %v1161, 16
        %v1188 = vshrl.u32 %v1165, 16
        %v1189 = vpack.i.b16 %v1188, %v1187
        %v1192 = vunpack.c.l.s4 1983009808
        %v1193 = vunpack.c.0.s8 %v1192
        %v1194 = vperm.slane %v1168, %v1193
        %v1197 = vunpack.c.l.s4 1983009808
        %v1198 = vunpack.c.0.s8 %v1197
        %v1199 = vperm.slane %v1174, %v1198
        %v1200 = vrot.slane %v1199, 4
        %v1201 = vsel %vm683, %v1200, %v1194
        %v1202 = vrot.slane %v1194, 4
        %v1203 = vsel %vm683, %v1199, %v1202
        %v1205 = vunpack.c.l.s4 1934713408
        %v1206 = vunpack.c.0.s8 %v1205
        %v1207 = vperm.slane %v1201, %v1206
        %v1209 = vunpack.c.l.s4 1934713408
        %v1210 = vunpack.c.0.s8 %v1209
        %v1211 = vperm.slane %v1203, %v1210
        %v1212 = vrot.slane %v1207, 4
        %v1213 = vsel %vm683, 0, %v1212
        %v1214 = vrot.slane %v1211, 4
        %v1215 = vsel %vm683, 0, %v1214
        %v1218 = vunpack.c.l.s4 1983009808
        %v1219 = vunpack.c.0.s8 %v1218
        %v1220 = vperm.slane %v1171, %v1219
        %v1223 = vunpack.c.l.s4 1983009808
        %v1224 = vunpack.c.0.s8 %v1223
        %v1225 = vperm.slane %v1177, %v1224
        %v1226 = vrot.slane %v1225, 4
        %v1227 = vsel %vm683, %v1226, %v1220
        %v1228 = vrot.slane %v1220, 4
        %v1229 = vsel %vm683, %v1225, %v1228
        %v1231 = vunpack.c.l.s4 1934713408
        %v1232 = vunpack.c.0.s8 %v1231
        %v1233 = vperm.slane %v1227, %v1232
        %v1235 = vunpack.c.l.s4 1934713408
        %v1236 = vunpack.c.0.s8 %v1235
        %v1237 = vperm.slane %v1229, %v1236
        %v1238 = vrot.slane %v1233, 4
        %v1239 = vsel %vm683, 0, %v1238
        %v1240 = vrot.slane %v1237, 4
        %v1241 = vsel %vm683, 0, %v1240
        %v1244 = vunpack.c.l.s4 1983009808
        %v1245 = vunpack.c.0.s8 %v1244
        %v1246 = vperm.slane %v1180, %v1245
        %v1249 = vunpack.c.l.s4 1983009808
        %v1250 = vunpack.c.0.s8 %v1249
        %v1251 = vperm.slane %v1186, %v1250
        %v1252 = vrot.slane %v1251, 4
        %v1253 = vsel %vm683, %v1252, %v1246
        %v1254 = vrot.slane %v1246, 4
        %v1255 = vsel %vm683, %v1251, %v1254
        %v1257 = vunpack.c.l.s4 1934713408
        %v1258 = vunpack.c.0.s8 %v1257
        %v1259 = vperm.slane %v1253, %v1258
        %v1261 = vunpack.c.l.s4 1934713408
        %v1262 = vunpack.c.0.s8 %v1261
        %v1263 = vperm.slane %v1255, %v1262
        %v1264 = vrot.slane %v1259, 4
        %v1265 = vsel %vm683, 0, %v1264
        %v1266 = vrot.slane %v1263, 4
        %v1267 = vsel %vm683, 0, %v1266
        %v1270 = vunpack.c.l.s4 1983009808
        %v1271 = vunpack.c.0.s8 %v1270
        %v1272 = vperm.slane %v1183, %v1271
        %v1275 = vunpack.c.l.s4 1983009808
        %v1276 = vunpack.c.0.s8 %v1275
        %v1277 = vperm.slane %v1189, %v1276
        %v1278 = vrot.slane %v1277, 4
        %v1279 = vsel %vm683, %v1278, %v1272
        %v1280 = vrot.slane %v1272, 4
        %v1281 = vsel %vm683, %v1277, %v1280
        %v1283 = vunpack.c.l.s4 1934713408
        %v1284 = vunpack.c.0.s8 %v1283
        %v1285 = vperm.slane %v1279, %v1284
        %v1287 = vunpack.c.l.s4 1934713408
        %v1288 = vunpack.c.0.s8 %v1287
        %v1289 = vperm.slane %v1281, %v1288
        %v1290 = vrot.slane %v1285, 4
        %v1291 = vsel %vm683, 0, %v1290
        %v1292 = vrot.slane %v1289, 4
        %v1293 = vsel %vm683, 0, %v1292
        %v1294 = vsel %vm683, %v1214, %v1207
        %v1296 = vunpack.c.l.s4 1983009808
        %v1297 = vunpack.c.0.s8 %v1296
        %v1298 = vperm.slane %v1294, %v1297
        %v1299 = vrot.slane %v1215, 4
        %v1300 = vsel %vm683, %v1299, %v1213
        %v1302 = vunpack.c.l.s4 1983009808
        %v1303 = vunpack.c.0.s8 %v1302
        %v1304 = vperm.slane %v1300, %v1303
        %v1305 = vrot.slane %v1304, 4
        %v1306 = vsel %vm683, %v1305, %v1298
        %v1308 = vunpack.c.l.s4 1934713408
        %v1309 = vunpack.c.0.s8 %v1308
        %v1310 = vperm.slane %v1306, %v1309
        %v1311 = vrot.slane %v1310, 4
        %v1312 = vsel %vm683, 0, %v1311
        %v1313 = vsel %vm683, %v1240, %v1233
        %v1315 = vunpack.c.l.s4 1983009808
        %v1316 = vunpack.c.0.s8 %v1315
        %v1317 = vperm.slane %v1313, %v1316
        %v1318 = vrot.slane %v1241, 4
        %v1319 = vsel %vm683, %v1318, %v1239
        %v1321 = vunpack.c.l.s4 1983009808
        %v1322 = vunpack.c.0.s8 %v1321
        %v1323 = vperm.slane %v1319, %v1322
        %v1324 = vrot.slane %v1323, 4
        %v1325 = vsel %vm683, %v1324, %v1317
        %v1327 = vunpack.c.l.s4 1934713408
        %v1328 = vunpack.c.0.s8 %v1327
        %v1329 = vperm.slane %v1325, %v1328
        %v1330 = vrot.slane %v1329, 4
        %v1331 = vsel %vm683, 0, %v1330
        %v1332 = vsel %vm683, %v1266, %v1259
        %v1334 = vunpack.c.l.s4 1983009808
        %v1335 = vunpack.c.0.s8 %v1334
        %v1336 = vperm.slane %v1332, %v1335
        %v1337 = vrot.slane %v1267, 4
        %v1338 = vsel %vm683, %v1337, %v1265
        %v1340 = vunpack.c.l.s4 1983009808
        %v1341 = vunpack.c.0.s8 %v1340
        %v1342 = vperm.slane %v1338, %v1341
        %v1343 = vrot.slane %v1342, 4
        %v1344 = vsel %vm683, %v1343, %v1336
        %v1346 = vunpack.c.l.s4 1934713408
        %v1347 = vunpack.c.0.s8 %v1346
        %v1348 = vperm.slane %v1344, %v1347
        %v1349 = vrot.slane %v1348, 4
        %v1350 = vsel %vm683, 0, %v1349
        %v1351 = vsel %vm683, %v1292, %v1285
        %v1353 = vunpack.c.l.s4 1983009808
        %v1354 = vunpack.c.0.s8 %v1353
        %v1355 = vperm.slane %v1351, %v1354
        %v1356 = vrot.slane %v1293, 4
        %v1357 = vsel %vm683, %v1356, %v1291
        %v1359 = vunpack.c.l.s4 1983009808
        %v1360 = vunpack.c.0.s8 %v1359
        %v1361 = vperm.slane %v1357, %v1360
        %v1362 = vrot.slane %v1361, 4
        %v1363 = vsel %vm683, %v1362, %v1355
        %v1365 = vunpack.c.l.s4 1934713408
        %v1366 = vunpack.c.0.s8 %v1365
        %v1367 = vperm.slane %v1363, %v1366
        %v1368 = vrot.slane %v1367, 4
        %v1369 = vsel %vm683, 0, %v1368
        %v1372 = vpack.i.b16 %v1329, %v1310
        %v1374 = vshrl.u32 %v1310, 16
        %v1375 = vshrl.u32 %v1329, 16
        %v1376 = vpack.i.b16 %v1375, %v1374
        %v1380 = vpack.i.b16 %v1331, %v1312
        %v1382 = vshrl.u32 %v1312, 16
        %v1383 = vshrl.u32 %v1331, 16
        %v1384 = vpack.i.b16 %v1383, %v1382
        %v1388 = vpack.i.b16 %v1367, %v1348
        %v1390 = vshrl.u32 %v1348, 16
        %v1391 = vshrl.u32 %v1367, 16
        %v1392 = vpack.i.b16 %v1391, %v1390
        %v1396 = vpack.i.b16 %v1369, %v1350
        %v1398 = vshrl.u32 %v1350, 16
        %v1399 = vshrl.u32 %v1369, 16
        %v1400 = vpack.i.b16 %v1399, %v1398
        %1402 = vst.msk [vmem:[%s465] sm:$0xf] %vm885, %v1372
        %1403 = vst.msk [vmem:[%s465 + $0x4] sm:$0xf] %vm885, %v1388
        %1404 = vst.msk [vmem:[%s465 + $0x8] sm:$0xf] %vm885, %v1376
        %1405 = vst.msk [vmem:[%s465 + $0xc] sm:$0xf] %vm885, %v1392
        %1406 = vst.msk [vmem:[%s465 + $0x10] sm:$0xf] %vm885, %v1380
        %1407 = vst.msk [vmem:[%s465 + $0x14] sm:$0xf] %vm885, %v1396
        %1408 = vst.msk [vmem:[%s465 + $0x18] sm:$0xf] %vm885, %v1384
        %1409 = vst.msk [vmem:[%s465 + $0x1c] sm:$0xf] %vm885, %v1400
        %s1410 = smul.u32 2, %s30
        %p1411 = scmp.lt.s32.totalorder %s29, 1
        %s1412 = scalar_select %p1411, %s29, 1
        %p1413 = scmp.lt.s32.totalorder %s1410, 1
        %s1414 = scalar_select %p1413, %s1410, 1
        %s1415 = smul.addr %s1412, 8
        %s1416 = sadd.s32 %s1414, %s1415
        %s1417 = smul.addr %s1416, 4
        %s1418 = scalar_lea.vmem %s6, %s1417
        %s1419 = smul.u32 2, %s30
        %p1420 = scmp.lt.s32.totalorder %s29, 1
        %s1421 = scalar_select %p1420, %s29, 1
        %p1422 = scmp.lt.s32.totalorder %s1419, 1
        %s1423 = scalar_select %p1422, %s1419, 1
        %s1424 = smul.addr %s1421, 8
        %s1425 = sadd.s32 %s1423, %s1424
        %s1426 = smul.addr %s1425, 4
        %s1427 = scalar_lea.vmem %s7, %s1426
        %s1428 = smul.u32 2, %s30
        %p1429 = scmp.lt.s32.totalorder %s29, 1
        %s1430 = scalar_select %p1429, %s29, 1
        %p1431 = scmp.lt.s32.totalorder %s1428, 1
        %s1432 = scalar_select %p1431, %s1428, 1
        %s1433 = smul.addr %s1430, 8
        %s1434 = sadd.s32 %s1432, %s1433
        %s1435 = smul.addr %s1434, 4
        %s1436 = scalar_lea.vmem %s8, %s1435
        // Predicated region
        $region65: #{tpu_custom_call.1} parent=43 // pred_check
          %p1437 = pneg %p190
        $region66: #{tpu_custom_call.1} parent=43 // pred_check_branch
          %1439 = sbr.rel (%p1437) target = $region68
        $region67: #{tpu_custom_call.1} parent=43 // pred_region
          %s1440 = smul.u32 2, %s30
        $region68: #{tpu_custom_call.1} parent=43 // pred_fallthru
          _
        // Predicated region
        $region69: #{tpu_custom_call.1} parent=43 // pred_check
          %p1441 = pneg %p218
        $region70: #{tpu_custom_call.1} parent=43 // pred_check_branch
          %1443 = sbr.rel (%p1441) target = $region72
        $region71: #{tpu_custom_call.1} parent=43 // pred_region
          %s1444 = smul.u32 2, %s30
        $region72: #{tpu_custom_call.1} parent=43 // pred_fallthru
          _
        // Predicated region
        $region73: #{tpu_custom_call.1} parent=43 // pred_check
          %p1445 = pneg %p246
        $region74: #{tpu_custom_call.1} parent=43 // pred_check_branch
          %1447 = sbr.rel (%p1445) target = $region76
        $region75: #{tpu_custom_call.1} parent=43 // pred_region
          %s1448 = smul.u32 2, %s30
        $region76: #{tpu_custom_call.1} parent=43 // pred_fallthru
          _
      $region44: #{tpu_custom_call.1} parent=5 // pred_fallthru
        _
      %p1449 = scmp.le.s32.totalorder 2, %s20
      // Predicated region
      $region77: #{tpu_custom_call.1} parent=5 // pred_check
        %p1450 = pneg %p1449
      $region78: #{tpu_custom_call.1} parent=5 // pred_check_branch
        %1452 = sbr.rel (%p1450) target = $region80
      $region79: #{tpu_custom_call.1} parent=5 // pred_region
        %s1453 = ssub.s32 %s20, 2
        // Predicated region
        $region81: #{tpu_custom_call.1} parent=79 // pred_check
          %p1454 = pneg %p196
        $region82: #{tpu_custom_call.1} parent=79 // pred_check_branch
          %1456 = sbr.rel (%p1454) target = $region84
        $region83: #{tpu_custom_call.1} parent=79 // pred_region
          %s1457 = smul.u32 2, %s32
          %p1458 = scmp.lt.s32.totalorder %s31, 1
          %s1459 = scalar_select %p1458, %s31, 1
          %p1460 = scmp.lt.s32.totalorder %s1457, 1
          %s1461 = scalar_select %p1460, %s1457, 1
          %s1462 = smul.addr %s1459, 8
          %s1463 = sadd.s32 %s1461, %s1462
          %s1464 = smul.addr %s1463, 4
          %s1465 = scalar_lea.vmem %s6, %s1464
        $region84: #{tpu_custom_call.1} parent=79 // pred_fallthru
          _
        // Predicated region
        $region85: #{tpu_custom_call.1} parent=79 // pred_check
          %p1466 = pneg %p224
        $region86: #{tpu_custom_call.1} parent=79 // pred_check_branch
          %1468 = sbr.rel (%p1466) target = $region88
        $region87: #{tpu_custom_call.1} parent=79 // pred_region
          %s1469 = smul.u32 2, %s32
          %p1470 = scmp.lt.s32.totalorder %s31, 1
          %s1471 = scalar_select %p1470, %s31, 1
          %p1472 = scmp.lt.s32.totalorder %s1469, 1
          %s1473 = scalar_select %p1472, %s1469, 1
          %s1474 = smul.addr %s1471, 8
          %s1475 = sadd.s32 %s1473, %s1474
          %s1476 = smul.addr %s1475, 4
          %s1477 = scalar_lea.vmem %s7, %s1476
        $region88: #{tpu_custom_call.1} parent=79 // pred_fallthru
          _
        // Predicated region
        $region89: #{tpu_custom_call.1} parent=79 // pred_check
          %p1478 = pneg %p252
        $region90: #{tpu_custom_call.1} parent=79 // pred_check_branch
          %1480 = sbr.rel (%p1478) target = $region92
        $region91: #{tpu_custom_call.1} parent=79 // pred_region
          %s1481 = smul.u32 2, %s32
          %p1482 = scmp.lt.s32.totalorder %s31, 1
          %s1483 = scalar_select %p1482, %s31, 1
          %p1484 = scmp.lt.s32.totalorder %s1481, 1
          %s1485 = scalar_select %p1484, %s1481, 1
          %s1486 = smul.addr %s1483, 8
          %s1487 = sadd.s32 %s1485, %s1486
          %s1488 = smul.addr %s1487, 4
          %s1489 = scalar_lea.vmem %s8, %s1488
        $region92: #{tpu_custom_call.1} parent=79 // pred_fallthru
          _
      $region80: #{tpu_custom_call.1} parent=5 // pred_fallthru
        _
    $region6: #{tpu_custom_call.1} parent=1 // loop_footer
      %s24 = sadd.s32 1, %s20
    $region7: #{tpu_custom_call.1} parent=1 // loop_footer_branch
      %19 = sbr.rel target = $region3
    $region8: #{tpu_custom_call.1} parent=1 // loop_exit
      _
    %1490 = vsyncpa [#allocation3], 1
    %s1491 = scalar_lea.sflag [#allocation3], 1
    %1492 = vsyncpa %s1491, 1
    %1493 = vsyncpa [#allocation5], 1
    %1494 = vsyncpa [#allocation8], 1

</llo_original>
